<compile_context>
chip_gen: v5e
topology: v5e:2x2
jax: 0.10.0
libtpu: 0.0.40
codegen_flags: <defaults>
</compile_context>

<pallas_src>
import functools

import jax
import jax.numpy as jnp
from jax import lax
from jax.experimental import pallas as pl
from jax.experimental.pallas import tpu as pltpu


def ns_mlp_kernel(xyz_ref, w1_ref, b1_ref, wm_ref, bm_ref, wl_ref, bl_ref,
                  o_ref, *, num_mid, use_fori):
    """One batch-tile of the NSNeuralNet forward pass."""
    xyz = xyz_ref[...]                      # (TM, 3) raw coords, f32
    tm = xyz.shape[0]
    half = tm // 2                          # static (wrapper guarantees tm%16==0)

    # --- first layer ------------------------------------------------------
    # Normalization is already folded into w1/b1 by the wrapper; contraction
    # dim is only 3, so do 3 broadcast-FMAs on the VPU instead of an MXU pass.
    w1 = w1_ref[...]                        # (3, H)  f32
    b1 = b1_ref[...]                        # (1, H)  f32
    h = jnp.tanh(xyz[:, 0:1] * w1[0:1, :]
                 + xyz[:, 1:2] * w1[1:2, :]
                 + xyz[:, 2:3] * w1[2:3, :]
                 + b1)                      # (TM, H) f32

    # Split into two independent halves so tanh (EUP) of one half can overlap
    # with the next matmul (MXU) of the other half.
    hA = h[:half].astype(jnp.bfloat16)
    hB = h[half:].astype(jnp.bfloat16)

    def hidden_layer(hA, hB, w, b):
        # bf16 operands, f32 accumulation; bias + tanh in f32, re-cast to bf16.
        sA = jnp.dot(hA, w, preferred_element_type=jnp.float32)
        sB = jnp.dot(hB, w, preferred_element_type=jnp.float32)
        return (jnp.tanh(sA + b).astype(jnp.bfloat16),
                jnp.tanh(sB + b).astype(jnp.bfloat16))

    if use_fori:
        # Deep configs: keep code size flat (layers are serially dependent
        # anyway, so dynamic indexing costs nothing on the MXU/EUP path).
        def body(l, carry):
            cA, cB = carry
            return hidden_layer(cA, cB, wm_ref[l], bm_ref[l])
        hA, hB = lax.fori_loop(0, num_mid, body, (hA, hB))
    else:
        for l in range(num_mid):
            hA, hB = hidden_layer(hA, hB, wm_ref[l], bm_ref[l])

    # --- final Linear -> (TM, 4) = [p, u, v, w] ----------------------------
    wl = wl_ref[...]                        # (H, 4) bf16
    bl = bl_ref[...]                        # (1, 4) f32
    outA = jnp.dot(hA, wl, preferred_element_type=jnp.float32) + bl
    outB = jnp.dot(hB, wl, preferred_element_type=jnp.float32) + bl

    # boundary factor (1-x^2)(1-y^2)(1-z^2) applied to u, v, w (cols 1..3)
    fac = ((1.0 - xyz[:, 0:1] ** 2) *
           (1.0 - xyz[:, 1:2] ** 2) *
           (1.0 - xyz[:, 2:3] ** 2))        # (TM, 1)

    colA = lax.broadcasted_iota(jnp.int32, outA.shape, 1)
    scaleA = jnp.where(colA == 0, 1.0, fac[:half])
    colB = lax.broadcasted_iota(jnp.int32, outB.shape, 1)
    scaleB = jnp.where(colB == 0, 1.0, fac[half:])

    o_ref[:half, :] = (outA * scaleA).astype(o_ref.dtype)
    o_ref[half:, :] = (outB * scaleB).astype(o_ref.dtype)


def ns_neural_net_forward(x, y, z, params, input_min, input_max, *,
                          tm=512, vmem_limit_bytes=None):
    """x, y, z: (N, 1) float32 each.  Returns (N, 4) = [p, u, v, w]."""
    xyz = jnp.concatenate([x, y, z], axis=1).astype(jnp.float32)     # (N, 3)
    N = xyz.shape[0]
    w1, b1, wm, bm, wl, bl = params
    H = w1.shape[1]
    num_mid = wm.shape[0]
    out_dim = wl.shape[1]

    # Pick a tile (never larger than the padded point count) and pad N up to a
    # multiple of it.  Padded rows are harmless (per-row-independent model) and
    # are sliced off below.
    tm = max(16, min(tm, ((N + 15) // 16) * 16))
    if tm % 16 != 0:
        raise ValueError("tm must be a multiple of 16")
    n_pad = ((N + tm - 1) // tm) * tm
    if n_pad != N:
        xyz = jnp.pad(xyz, ((0, n_pad - N), (0, 0)))

    # Fold input normalization  xn = 2*(xyz-min)/(max-min) - 1  into W1/b1.
    imin = input_min.reshape(1, 3).astype(jnp.float32)
    imax = input_max.reshape(1, 3).astype(jnp.float32)
    scale = 2.0 / (imax - imin)                      # (1, 3)
    shift = -imin * scale - 1.0                      # (1, 3)
    w1f = (scale.reshape(3, 1) * w1).astype(jnp.float32)   # (3, H)
    b1f = (b1 + shift @ w1).astype(jnp.float32)            # (1, H)

    # bf16 weights for the MXU layers; biases stay f32.
    wm_b = wm.astype(jnp.bfloat16)                   # (num_mid, H, H)
    wl_b = wl.astype(jnp.bfloat16)                   # (H, out_dim)
    bm_f = bm.astype(jnp.float32)                    # (num_mid, 1, H)
    bl_f = bl.astype(jnp.float32)                    # (1, out_dim)

    kernel = functools.partial(ns_mlp_kernel, num_mid=num_mid,
                               use_fori=(num_mid > 4))

    cp_kwargs = dict(dimension_semantics=("parallel",))
    if vmem_limit_bytes is not None:
        # v5e's default scoped VMEM is 16 MiB; set explicitly for very large tm.
        cp_kwargs["vmem_limit_bytes"] = vmem_limit_bytes

    out = pl.pallas_call(
        kernel,
        out_shape=jax.ShapeDtypeStruct((n_pad, out_dim), jnp.float32),
        grid_spec=pltpu.PrefetchScalarGridSpec(
            num_scalar_prefetch=0,
            grid=(n_pad // tm,),
            in_specs=[
                pl.BlockSpec((tm, 3), lambda i: (i, 0)),              # xyz tile
                pl.BlockSpec((3, H), lambda i: (0, 0)),               # W1 (folded)
                pl.BlockSpec((1, H), lambda i: (0, 0)),               # b1 (folded)
                pl.BlockSpec((num_mid, H, H), lambda i: (0, 0, 0)),   # hidden Ws
                pl.BlockSpec((num_mid, 1, H), lambda i: (0, 0, 0)),   # hidden bs
                pl.BlockSpec((H, out_dim), lambda i: (0, 0)),         # W_last
                pl.BlockSpec((1, out_dim), lambda i: (0, 0)),         # b_last
            ],
            out_specs=pl.BlockSpec((tm, out_dim), lambda i: (i, 0)),
        ),
        compiler_params=pltpu.CompilerParams(**cp_kwargs),
    )(xyz, w1f, b1f, wm_b, bm_f, wl_b, bl_f)

    return out[:N]


def init_params(key, input_size, output_size, num_layers, units_per_layer):
    """Deterministic nn.Linear-style init (uniform +-1/sqrt(fan_in))."""
    keys = jax.random.split(key, 2 * num_layers)

    def linear(kw, kb, fan_in, fan_out):
        bound = 1.0 / jnp.sqrt(jnp.float32(fan_in))
        w = jax.random.uniform(kw, (fan_in, fan_out), jnp.float32, -bound, bound)
        b = jax.random.uniform(kb, (1, fan_out), jnp.float32, -bound, bound)
        return w, b

    w1, b1 = linear(keys[0], keys[1], input_size, units_per_layer)
    wm_list, bm_list = [], []
    for l in range(num_layers - 2):
        w, b = linear(keys[2 + 2 * l], keys[3 + 2 * l],
                      units_per_layer, units_per_layer)
        wm_list.append(w)
        bm_list.append(b)
    wm = jnp.stack(wm_list, axis=0)          # (num_mid, H, H)
    bm = jnp.stack(bm_list, axis=0)          # (num_mid, 1, H)
    wl, bl = linear(keys[-2], keys[-1], units_per_layer, output_size)
    return (w1, b1, wm, bm, wl, bl)


def reference_forward(x, y, z, params, input_min, input_max):
    """Pure-JAX f32 reference mirroring the PyTorch module."""
    w1, b1, wm, bm, wl, bl = params
    xyz = jnp.concatenate([x, y, z], axis=1)
    xn = 2.0 * (xyz - input_min[None]) / (input_max[None] - input_min[None]) - 1.0
    h = jnp.tanh(xn @ w1 + b1)
    for l in range(wm.shape[0]):
        h = jnp.tanh(h @ wm[l] + bm[l])
    out = h @ wl + bl
    fac = (1.0 - x ** 2) * (1.0 - y ** 2) * (1.0 - z ** 2)
    p = out[:, 0:1]
    uvw = out[:, 1:4] * fac
    return jnp.concatenate([p, uvw], axis=1)


if __name__ == "__main__":
    # Small, module-consistent config: 3 inputs -> 4 outputs, 6 Linear layers,
    # 128 hidden units, tanh activation.  N deliberately NOT a multiple of the
    # tile to exercise the padding path; tm=256 gives a 4-step grid (megacore).
    input_size, output_size = 3, 4
    num_layers, units_per_layer = 6, 128
    N = 1000

    key = jax.random.PRNGKey(0)
    kx, ky, kz, kp = jax.random.split(key, 4)
    x = jax.random.uniform(kx, (N, 1), jnp.float32, -0.9, 0.9)
    y = jax.random.uniform(ky, (N, 1), jnp.float32, -0.9, 0.9)
    z = jax.random.uniform(kz, (N, 1), jnp.float32, -0.9, 0.9)

    # Normalization bounds from the data, as in the original script.
    xyz_all = jnp.concatenate([x, y, z], axis=1)
    input_min = jnp.min(xyz_all, axis=0)
    input_max = jnp.max(xyz_all, axis=0)

    params = init_params(kp, input_size, output_size, num_layers,
                         units_per_layer)

    out = ns_neural_net_forward(x, y, z, params, input_min, input_max, tm=256)
    out = jax.block_until_ready(out)

    ref = reference_forward(x, y, z, params, input_min, input_max)
    assert out.shape == (N, output_size)
    # Hidden/final layers run in bf16 on the MXU (f32 accumulation), so compare
    # against the f32 reference with a correspondingly looser tolerance.
    assert jnp.allclose(out, ref, atol=5e-2, rtol=5e-2), "mismatch vs reference"

    print("KERNEL_OK")
</pallas_src>

<mosaic_0001>
module attributes {stable_mosaic.version = 11 : i64} {
  func.func @ns_mlp_kernel(%arg0: i32, %arg1: memref<256x3xf32, #tpu.memory_space<vmem>>, %arg2: memref<3x128xf32, #tpu.memory_space<vmem>>, %arg3: memref<1x128xf32, #tpu.memory_space<vmem>>, %arg4: memref<4x128x128xbf16, #tpu.memory_space<vmem>>, %arg5: memref<4x1x128xf32, #tpu.memory_space<vmem>>, %arg6: memref<128x4xbf16, #tpu.memory_space<vmem>>, %arg7: memref<1x4xf32, #tpu.memory_space<vmem>>, %arg8: memref<256x4xf32, #tpu.memory_space<vmem>>) attributes {dimension_semantics = [#tpu.dimension_semantics<parallel>], iteration_bounds = array<i64: 4>, scalar_prefetch = 0 : i64, scratch_operands = 0 : i64, tpu.core_type = #tpu.core_type<tc>, window_params = [{transform_indices = @transform_0, window_bounds = array<i64: 256, 3>}, {pipeline_mode = #tpu.pipeline_mode<synchronous>, transform_indices = @transform_1, window_bounds = array<i64: 3, 128>}, {pipeline_mode = #tpu.pipeline_mode<synchronous>, transform_indices = @transform_2, window_bounds = array<i64: 1, 128>}, {pipeline_mode = #tpu.pipeline_mode<synchronous>, transform_indices = @transform_3, window_bounds = array<i64: 4, 128, 128>}, {pipeline_mode = #tpu.pipeline_mode<synchronous>, transform_indices = @transform_4, window_bounds = array<i64: 4, 1, 128>}, {pipeline_mode = #tpu.pipeline_mode<synchronous>, transform_indices = @transform_5, window_bounds = array<i64: 128, 4>}, {pipeline_mode = #tpu.pipeline_mode<synchronous>, transform_indices = @transform_6, window_bounds = array<i64: 1, 4>}, {transform_indices = @transform_7, window_bounds = array<i64: 256, 4>}]} {
    %c0 = arith.constant 0 : index
    %c0_0 = arith.constant 0 : index
    %0 = vector.load %arg1[%c0, %c0_0] : memref<256x3xf32, #tpu.memory_space<vmem>>, vector<256x3xf32>
    %c0_1 = arith.constant 0 : index
    %c0_2 = arith.constant 0 : index
    %1 = vector.load %arg2[%c0_1, %c0_2] : memref<3x128xf32, #tpu.memory_space<vmem>>, vector<3x128xf32>
    %c0_3 = arith.constant 0 : index
    %c0_4 = arith.constant 0 : index
    %2 = vector.load %arg3[%c0_3, %c0_4] : memref<1x128xf32, #tpu.memory_space<vmem>>, vector<1x128xf32>
    %3 = vector.extract_strided_slice %0 {offsets = [0, 0], sizes = [256, 1], strides = [1, 1]} : vector<256x3xf32> to vector<256x1xf32>
    %4 = vector.extract_strided_slice %1 {offsets = [0, 0], sizes = [1, 128], strides = [1, 1]} : vector<3x128xf32> to vector<1x128xf32>
    %5 = vector.broadcast %3 : vector<256x1xf32> to vector<256x128xf32>
    %6 = vector.broadcast %4 : vector<1x128xf32> to vector<256x128xf32>
    %7 = arith.mulf %5, %6 : vector<256x128xf32>
    %8 = vector.extract_strided_slice %0 {offsets = [0, 1], sizes = [256, 1], strides = [1, 1]} : vector<256x3xf32> to vector<256x1xf32>
    %9 = vector.extract_strided_slice %1 {offsets = [1, 0], sizes = [1, 128], strides = [1, 1]} : vector<3x128xf32> to vector<1x128xf32>
    %10 = vector.broadcast %8 : vector<256x1xf32> to vector<256x128xf32>
    %11 = vector.broadcast %9 : vector<1x128xf32> to vector<256x128xf32>
    %12 = arith.mulf %10, %11 : vector<256x128xf32>
    %13 = arith.addf %7, %12 : vector<256x128xf32>
    %14 = vector.extract_strided_slice %0 {offsets = [0, 2], sizes = [256, 1], strides = [1, 1]} : vector<256x3xf32> to vector<256x1xf32>
    %15 = vector.extract_strided_slice %1 {offsets = [2, 0], sizes = [1, 128], strides = [1, 1]} : vector<3x128xf32> to vector<1x128xf32>
    %16 = vector.broadcast %14 : vector<256x1xf32> to vector<256x128xf32>
    %17 = vector.broadcast %15 : vector<1x128xf32> to vector<256x128xf32>
    %18 = arith.mulf %16, %17 : vector<256x128xf32>
    %19 = arith.addf %13, %18 : vector<256x128xf32>
    %20 = vector.broadcast %2 : vector<1x128xf32> to vector<256x128xf32>
    %21 = arith.addf %19, %20 : vector<256x128xf32>
    %22 = math.tanh %21 : vector<256x128xf32>
    %23 = vector.extract_strided_slice %22 {offsets = [0, 0], sizes = [128, 128], strides = [1, 1]} : vector<256x128xf32> to vector<128x128xf32>
    %24 = arith.truncf %23 : vector<128x128xf32> to vector<128x128xbf16>
    %25 = vector.extract_strided_slice %22 {offsets = [128, 0], sizes = [128, 128], strides = [1, 1]} : vector<256x128xf32> to vector<128x128xf32>
    %26 = arith.truncf %25 : vector<128x128xf32> to vector<128x128xbf16>
    %c0_5 = arith.constant 0 : index
    %c0_6 = arith.constant 0 : index
    %c0_7 = arith.constant 0 : index
    %27 = vector.load %arg4[%c0_5, %c0_6, %c0_7] : memref<4x128x128xbf16, #tpu.memory_space<vmem>>, vector<1x128x128xbf16>
    %28 = vector.shape_cast %27 : vector<1x128x128xbf16> to vector<128x128xbf16>
    %c0_8 = arith.constant 0 : index
    %c0_9 = arith.constant 0 : index
    %c0_10 = arith.constant 0 : index
    %29 = vector.load %arg5[%c0_8, %c0_9, %c0_10] : memref<4x1x128xf32, #tpu.memory_space<vmem>>, vector<1x1x128xf32>
    %30 = vector.shape_cast %29 : vector<1x1x128xf32> to vector<1x128xf32>
    %cst = arith.constant dense<0.000000e+00> : vector<128x128xf32>
    %31 = tpu.matmul %24, %28, %cst {dimension_numbers = #tpu.dot_dimension_numbers<[1], [0], [0], [1], [0, 0, 1, 1], [], []>} : vector<128x128xbf16>, vector<128x128xbf16>, vector<128x128xf32> -> vector<128x128xf32>
    %cst_11 = arith.constant dense<0.000000e+00> : vector<128x128xf32>
    %32 = tpu.matmul %26, %28, %cst_11 {dimension_numbers = #tpu.dot_dimension_numbers<[1], [0], [0], [1], [0, 0, 1, 1], [], []>} : vector<128x128xbf16>, vector<128x128xbf16>, vector<128x128xf32> -> vector<128x128xf32>
    %33 = vector.broadcast %30 : vector<1x128xf32> to vector<128x128xf32>
    %34 = arith.addf %31, %33 : vector<128x128xf32>
    %35 = math.tanh %34 : vector<128x128xf32>
    %36 = arith.truncf %35 : vector<128x128xf32> to vector<128x128xbf16>
    %37 = vector.broadcast %30 : vector<1x128xf32> to vector<128x128xf32>
    %38 = arith.addf %32, %37 : vector<128x128xf32>
    %39 = math.tanh %38 : vector<128x128xf32>
    %40 = arith.truncf %39 : vector<128x128xf32> to vector<128x128xbf16>
    %c1 = arith.constant 1 : index
    %c0_12 = arith.constant 0 : index
    %c0_13 = arith.constant 0 : index
    %41 = vector.load %arg4[%c1, %c0_12, %c0_13] : memref<4x128x128xbf16, #tpu.memory_space<vmem>>, vector<1x128x128xbf16>
    %42 = vector.shape_cast %41 : vector<1x128x128xbf16> to vector<128x128xbf16>
    %c1_14 = arith.constant 1 : index
    %c0_15 = arith.constant 0 : index
    %c0_16 = arith.constant 0 : index
    %43 = vector.load %arg5[%c1_14, %c0_15, %c0_16] : memref<4x1x128xf32, #tpu.memory_space<vmem>>, vector<1x1x128xf32>
    %44 = vector.shape_cast %43 : vector<1x1x128xf32> to vector<1x128xf32>
    %cst_17 = arith.constant dense<0.000000e+00> : vector<128x128xf32>
    %45 = tpu.matmul %36, %42, %cst_17 {dimension_numbers = #tpu.dot_dimension_numbers<[1], [0], [0], [1], [0, 0, 1, 1], [], []>} : vector<128x128xbf16>, vector<128x128xbf16>, vector<128x128xf32> -> vector<128x128xf32>
    %cst_18 = arith.constant dense<0.000000e+00> : vector<128x128xf32>
    %46 = tpu.matmul %40, %42, %cst_18 {dimension_numbers = #tpu.dot_dimension_numbers<[1], [0], [0], [1], [0, 0, 1, 1], [], []>} : vector<128x128xbf16>, vector<128x128xbf16>, vector<128x128xf32> -> vector<128x128xf32>
    %47 = vector.broadcast %44 : vector<1x128xf32> to vector<128x128xf32>
    %48 = arith.addf %45, %47 : vector<128x128xf32>
    %49 = math.tanh %48 : vector<128x128xf32>
    %50 = arith.truncf %49 : vector<128x128xf32> to vector<128x128xbf16>
    %51 = vector.broadcast %44 : vector<1x128xf32> to vector<128x128xf32>
    %52 = arith.addf %46, %51 : vector<128x128xf32>
    %53 = math.tanh %52 : vector<128x128xf32>
    %54 = arith.truncf %53 : vector<128x128xf32> to vector<128x128xbf16>
    %c2 = arith.constant 2 : index
    %c0_19 = arith.constant 0 : index
    %c0_20 = arith.constant 0 : index
    %55 = vector.load %arg4[%c2, %c0_19, %c0_20] : memref<4x128x128xbf16, #tpu.memory_space<vmem>>, vector<1x128x128xbf16>
    %56 = vector.shape_cast %55 : vector<1x128x128xbf16> to vector<128x128xbf16>
    %c2_21 = arith.constant 2 : index
    %c0_22 = arith.constant 0 : index
    %c0_23 = arith.constant 0 : index
    %57 = vector.load %arg5[%c2_21, %c0_22, %c0_23] : memref<4x1x128xf32, #tpu.memory_space<vmem>>, vector<1x1x128xf32>
    %58 = vector.shape_cast %57 : vector<1x1x128xf32> to vector<1x128xf32>
    %cst_24 = arith.constant dense<0.000000e+00> : vector<128x128xf32>
    %59 = tpu.matmul %50, %56, %cst_24 {dimension_numbers = #tpu.dot_dimension_numbers<[1], [0], [0], [1], [0, 0, 1, 1], [], []>} : vector<128x128xbf16>, vector<128x128xbf16>, vector<128x128xf32> -> vector<128x128xf32>
    %cst_25 = arith.constant dense<0.000000e+00> : vector<128x128xf32>
    %60 = tpu.matmul %54, %56, %cst_25 {dimension_numbers = #tpu.dot_dimension_numbers<[1], [0], [0], [1], [0, 0, 1, 1], [], []>} : vector<128x128xbf16>, vector<128x128xbf16>, vector<128x128xf32> -> vector<128x128xf32>
    %61 = vector.broadcast %58 : vector<1x128xf32> to vector<128x128xf32>
    %62 = arith.addf %59, %61 : vector<128x128xf32>
    %63 = math.tanh %62 : vector<128x128xf32>
    %64 = arith.truncf %63 : vector<128x128xf32> to vector<128x128xbf16>
    %65 = vector.broadcast %58 : vector<1x128xf32> to vector<128x128xf32>
    %66 = arith.addf %60, %65 : vector<128x128xf32>
    %67 = math.tanh %66 : vector<128x128xf32>
    %68 = arith.truncf %67 : vector<128x128xf32> to vector<128x128xbf16>
    %c3 = arith.constant 3 : index
    %c0_26 = arith.constant 0 : index
    %c0_27 = arith.constant 0 : index
    %69 = vector.load %arg4[%c3, %c0_26, %c0_27] : memref<4x128x128xbf16, #tpu.memory_space<vmem>>, vector<1x128x128xbf16>
    %70 = vector.shape_cast %69 : vector<1x128x128xbf16> to vector<128x128xbf16>
    %c3_28 = arith.constant 3 : index
    %c0_29 = arith.constant 0 : index
    %c0_30 = arith.constant 0 : index
    %71 = vector.load %arg5[%c3_28, %c0_29, %c0_30] : memref<4x1x128xf32, #tpu.memory_space<vmem>>, vector<1x1x128xf32>
    %72 = vector.shape_cast %71 : vector<1x1x128xf32> to vector<1x128xf32>
    %cst_31 = arith.constant dense<0.000000e+00> : vector<128x128xf32>
    %73 = tpu.matmul %64, %70, %cst_31 {dimension_numbers = #tpu.dot_dimension_numbers<[1], [0], [0], [1], [0, 0, 1, 1], [], []>} : vector<128x128xbf16>, vector<128x128xbf16>, vector<128x128xf32> -> vector<128x128xf32>
    %cst_32 = arith.constant dense<0.000000e+00> : vector<128x128xf32>
    %74 = tpu.matmul %68, %70, %cst_32 {dimension_numbers = #tpu.dot_dimension_numbers<[1], [0], [0], [1], [0, 0, 1, 1], [], []>} : vector<128x128xbf16>, vector<128x128xbf16>, vector<128x128xf32> -> vector<128x128xf32>
    %75 = vector.broadcast %72 : vector<1x128xf32> to vector<128x128xf32>
    %76 = arith.addf %73, %75 : vector<128x128xf32>
    %77 = math.tanh %76 : vector<128x128xf32>
    %78 = arith.truncf %77 : vector<128x128xf32> to vector<128x128xbf16>
    %79 = vector.broadcast %72 : vector<1x128xf32> to vector<128x128xf32>
    %80 = arith.addf %74, %79 : vector<128x128xf32>
    %81 = math.tanh %80 : vector<128x128xf32>
    %82 = arith.truncf %81 : vector<128x128xf32> to vector<128x128xbf16>
    %c0_33 = arith.constant 0 : index
    %c0_34 = arith.constant 0 : index
    %83 = vector.load %arg6[%c0_33, %c0_34] : memref<128x4xbf16, #tpu.memory_space<vmem>>, vector<128x4xbf16>
    %c0_35 = arith.constant 0 : index
    %c0_36 = arith.constant 0 : index
    %84 = vector.load %arg7[%c0_35, %c0_36] : memref<1x4xf32, #tpu.memory_space<vmem>>, vector<1x4xf32>
    %cst_37 = arith.constant dense<0.000000e+00> : vector<128x4xf32>
    %85 = tpu.matmul %78, %83, %cst_37 {dimension_numbers = #tpu.dot_dimension_numbers<[1], [0], [0], [1], [0, 0, 1, 1], [], []>} : vector<128x128xbf16>, vector<128x4xbf16>, vector<128x4xf32> -> vector<128x4xf32>
    %86 = vector.broadcast %84 : vector<1x4xf32> to vector<128x4xf32>
    %87 = arith.addf %85, %86 : vector<128x4xf32>
    %cst_38 = arith.constant dense<0.000000e+00> : vector<128x4xf32>
    %88 = tpu.matmul %82, %83, %cst_38 {dimension_numbers = #tpu.dot_dimension_numbers<[1], [0], [0], [1], [0, 0, 1, 1], [], []>} : vector<128x128xbf16>, vector<128x4xbf16>, vector<128x4xf32> -> vector<128x4xf32>
    %89 = vector.broadcast %84 : vector<1x4xf32> to vector<128x4xf32>
    %90 = arith.addf %88, %89 : vector<128x4xf32>
    %91 = vector.extract_strided_slice %0 {offsets = [0, 0], sizes = [256, 1], strides = [1, 1]} : vector<256x3xf32> to vector<256x1xf32>
    %92 = arith.mulf %91, %91 : vector<256x1xf32>
    %cst_39 = arith.constant 1.000000e+00 : f32
    %93 = vector.broadcast %cst_39 : f32 to vector<256x1xf32>
    %94 = arith.subf %93, %92 : vector<256x1xf32>
    %95 = vector.extract_strided_slice %0 {offsets = [0, 1], sizes = [256, 1], strides = [1, 1]} : vector<256x3xf32> to vector<256x1xf32>
    %96 = arith.mulf %95, %95 : vector<256x1xf32>
    %cst_40 = arith.constant 1.000000e+00 : f32
    %97 = vector.broadcast %cst_40 : f32 to vector<256x1xf32>
    %98 = arith.subf %97, %96 : vector<256x1xf32>
    %99 = arith.mulf %94, %98 : vector<256x1xf32>
    %100 = vector.extract_strided_slice %0 {offsets = [0, 2], sizes = [256, 1], strides = [1, 1]} : vector<256x3xf32> to vector<256x1xf32>
    %101 = arith.mulf %100, %100 : vector<256x1xf32>
    %cst_41 = arith.constant 1.000000e+00 : f32
    %102 = vector.broadcast %cst_41 : f32 to vector<256x1xf32>
    %103 = arith.subf %102, %101 : vector<256x1xf32>
    %104 = arith.mulf %99, %103 : vector<256x1xf32>
    %105 = tpu.iota {dimensions = array<i32: 1>} : vector<128x4xi32>
    %c0_i32 = arith.constant 0 : i32
    %106 = vector.broadcast %c0_i32 : i32 to vector<128x4xi32>
    %107 = arith.cmpi eq, %105, %106 : vector<128x4xi32>
    %108 = vector.extract_strided_slice %104 {offsets = [0, 0], sizes = [128, 1], strides = [1, 1]} : vector<256x1xf32> to vector<128x1xf32>
    %cst_42 = arith.constant 1.000000e+00 : f32
    %109 = vector.broadcast %cst_42 : f32 to vector<128x4xf32>
    %110 = vector.shape_cast %108 : vector<128x1xf32> to vector<128x1xf32>
    %111 = vector.broadcast %110 : vector<128x1xf32> to vector<128x4xf32>
    %112 = arith.select %107, %109, %111 : vector<128x4xi1>, vector<128x4xf32>
    %113 = tpu.iota {dimensions = array<i32: 1>} : vector<128x4xi32>
    %c0_i32_43 = arith.constant 0 : i32
    %114 = vector.broadcast %c0_i32_43 : i32 to vector<128x4xi32>
    %115 = arith.cmpi eq, %113, %114 : vector<128x4xi32>
    %116 = vector.extract_strided_slice %104 {offsets = [128, 0], sizes = [128, 1], strides = [1, 1]} : vector<256x1xf32> to vector<128x1xf32>
    %cst_44 = arith.constant 1.000000e+00 : f32
    %117 = vector.broadcast %cst_44 : f32 to vector<128x4xf32>
    %118 = vector.shape_cast %116 : vector<128x1xf32> to vector<128x1xf32>
    %119 = vector.broadcast %118 : vector<128x1xf32> to vector<128x4xf32>
    %120 = arith.select %115, %117, %119 : vector<128x4xi1>, vector<128x4xf32>
    %121 = arith.mulf %87, %112 : vector<128x4xf32>
    %c0_45 = arith.constant 0 : index
    %c0_46 = arith.constant 0 : index
    %122 = vector.load %arg8[%c0_45, %c0_46] : memref<256x4xf32, #tpu.memory_space<vmem>>, vector<128x4xf32>
    tpu.vector_store %arg8[%c0_45, %c0_46], %121 {strides = array<i32>} : memref<256x4xf32, #tpu.memory_space<vmem>>, vector<128x4xf32>,
    %123 = arith.mulf %90, %120 : vector<128x4xf32>
    %c128 = arith.constant 128 : index
    %c0_47 = arith.constant 0 : index
    %124 = vector.load %arg8[%c128, %c0_47] : memref<256x4xf32, #tpu.memory_space<vmem>>, vector<128x4xf32>
    tpu.vector_store %arg8[%c128, %c0_47], %123 {strides = array<i32>} : memref<256x4xf32, #tpu.memory_space<vmem>>, vector<128x4xf32>,
    return
  }
  func.func @transform_0(%arg0: i32) -> (i32, i32) {
    %c0_i32 = arith.constant 0 : i32
    %c0_i32_0 = arith.constant 0 : i32
    return %arg0, %c0_i32 : i32, i32
  }
  func.func @transform_1(%arg0: i32) -> (i32, i32) {
    %c0_i32 = arith.constant 0 : i32
    %c0_i32_0 = arith.constant 0 : i32
    %c0_i32_1 = arith.constant 0 : i32
    return %c0_i32, %c0_i32_0 : i32, i32
  }
  func.func @transform_2(%arg0: i32) -> (i32, i32) {
    %c0_i32 = arith.constant 0 : i32
    %c0_i32_0 = arith.constant 0 : i32
    %c0_i32_1 = arith.constant 0 : i32
    return %c0_i32, %c0_i32_0 : i32, i32
  }
  func.func @transform_3(%arg0: i32) -> (i32, i32, i32) {
    %c0_i32 = arith.constant 0 : i32
    %c0_i32_0 = arith.constant 0 : i32
    %c0_i32_1 = arith.constant 0 : i32
    %c0_i32_2 = arith.constant 0 : i32
    return %c0_i32, %c0_i32_0, %c0_i32_1 : i32, i32, i32
  }
  func.func @transform_4(%arg0: i32) -> (i32, i32, i32) {
    %c0_i32 = arith.constant 0 : i32
    %c0_i32_0 = arith.constant 0 : i32
    %c0_i32_1 = arith.constant 0 : i32
    %c0_i32_2 = arith.constant 0 : i32
    return %c0_i32, %c0_i32_0, %c0_i32_1 : i32, i32, i32
  }
  func.func @transform_5(%arg0: i32) -> (i32, i32) {
    %c0_i32 = arith.constant 0 : i32
    %c0_i32_0 = arith.constant 0 : i32
    %c0_i32_1 = arith.constant 0 : i32
    return %c0_i32, %c0_i32_0 : i32, i32
  }
  func.func @transform_6(%arg0: i32) -> (i32, i32) {
    %c0_i32 = arith.constant 0 : i32
    %c0_i32_0 = arith.constant 0 : i32
    %c0_i32_1 = arith.constant 0 : i32
    return %c0_i32, %c0_i32_0 : i32, i32
  }
  func.func @transform_7(%arg0: i32) -> (i32, i32) {
    %c0_i32 = arith.constant 0 : i32
    %c0_i32_0 = arith.constant 0 : i32
    return %arg0, %c0_i32 : i32, i32
  }
}

</mosaic_0001>

<llo_original>
// kernel: tpu_custom_call.1
$region0: #{tpu_custom_call.1}
  #allocation0 [shape = 'u32[]', space=smem, size = 0x4, offset = 0x4, fixed_abs, tag = 'smem constant byte address 0x4 - core index']
  #allocation1 [shape = 'u32[72,128]{1,0:T(1,128)}', space=vmem, size = 0x9000, scoped, tag = 'internal scratch']
  %s0 = inlined_call_operand.vmem [shape: f32[1024,3], index: 0, kind: input, shape index: {}]
  %s1 = inlined_call_operand.vmem [shape: f32[3,128], index: 1, kind: input, shape index: {}]
  %s2 = inlined_call_operand.vmem [shape: f32[1,128], index: 2, kind: input, shape index: {}]
  %s3 = inlined_call_operand.vmem [shape: bf16[4,128,128], index: 3, kind: input, shape index: {}]
  %s4 = inlined_call_operand.vmem [shape: f32[4,1,128], index: 4, kind: input, shape index: {}]
  %s5 = inlined_call_operand.vmem [shape: bf16[128,4], index: 5, kind: input, shape index: {}]
  %s6 = inlined_call_operand.vmem [shape: f32[1,4], index: 6, kind: input, shape index: {}]
  %s7 = inlined_call_operand.vmem [shape: f32[1024,4], index: 7, kind: output, shape index: {}]
  %s8 = sld [smem:[#allocation0]]
  $region61: #{tpu_custom_call.1} parent=0
    _
  %s10 = ssub.s32 1, %s8
  %s11 = scalar_select 0, %s10, %s8
  loop: start=0, step=1, limit=6
  $region2: #{tpu_custom_call.1} parent=0 // loop_pre_header
    _
  $region3: #{tpu_custom_call.1} parent=0 // loop_header
    %s13 = sphi 0, %s17
    %p14 = scmp.ge.s32.totalorder %s13, 6
    %s23 = sphi 0, %s25
    %s26 = sphi 0, %s23
    %s27 = sphi 0, %s26
    %s43 = sphi 0, %s27
    %s47 = sphi 0, %s47
    %s49 = sphi 0, %s47
    %s50 = sphi 0, %s49
    %s64 = sphi 0, %s50
    %s68 = sphi 0, %s68
    %s70 = sphi 0, %s68
    %s71 = sphi 0, %s70
    %s85 = sphi 0, %s71
    %s89 = sphi 0, %s89
    %s91 = sphi 0, %s89
    %s92 = sphi 0, %s91
    %s106 = sphi 0, %s92
    %s110 = sphi 0, %s110
    %s112 = sphi 0, %s110
    %s113 = sphi 0, %s112
    %s127 = sphi 0, %s113
    %s131 = sphi 0, %s131
    %s133 = sphi 0, %s131
    %s134 = sphi 0, %s133
    %s148 = sphi 0, %s134
    %s152 = sphi 0, %s152
    %s154 = sphi 0, %s152
    %s155 = sphi 0, %s154
    %s169 = sphi 0, %s155
    %s175 = sphi 0, %s177
    %s178 = sphi 0, %s175
    %s179 = sphi 0, %s178
    %s195 = sphi 0, %s179
  $region4: #{tpu_custom_call.1} parent=0 // loop_header_branch
    %16 = sbr.rel (%p14) target = $region8
  $region5: #{tpu_custom_call.1} parent=0 // loop_body
    %s18 = ssub.s32 %s13, 1
    %s19 = ssub.s32 %s13, 2
    %s20 = sadd.s32 %s13, 1
    %s21 = ssub.s32 %s13, %s20
    %p22 = scmp.eq.s32.totalorder %s21, 0
    %s24 = sadd.s32 %s23, 1
    %s25 = scalar_select %p22, %s23, %s24
    %p28 = pneg %p22
    %p29 = scmp.eq.s32.totalorder %s13, 3
    %p30 = por %p28, %p29
    %p31 = scmp.ne.s32.totalorder %s23, %s26
    %p32 = scmp.eq.s32.totalorder %s13, 0
    %p33 = por %p31, %p32
    %p34 = scmp.ne.s32.totalorder %s23, %s26
    %p35 = scmp.eq.s32.totalorder %s18, 3
    %p36 = por %p34, %p35
    %p37 = scmp.ne.s32.totalorder %s26, %s27
    %p38 = scmp.eq.s32.totalorder %s18, 0
    %p39 = por %p37, %p38
    %p40 = scmp.ne.s32.totalorder %s26, %s27
    %p41 = scmp.eq.s32.totalorder %s19, 3
    %p42 = por %p40, %p41
    %p44 = scmp.ne.s32.totalorder %s27, %s43
    %p45 = scmp.eq.s32.totalorder %s19, 0
    %p46 = por %p44, %p45
    %s48 = sadd.s32 %s47, 1
    %p51 = scmp.eq.s32.totalorder %s13, 3
    %p52 = scmp.ne.s32.totalorder %s47, %s49
    %p53 = scmp.eq.s32.totalorder %s13, 0
    %p54 = por %p52, %p53
    %p55 = scmp.ne.s32.totalorder %s47, %s49
    %p56 = scmp.eq.s32.totalorder %s18, 3
    %p57 = por %p55, %p56
    %p58 = scmp.ne.s32.totalorder %s49, %s50
    %p59 = scmp.eq.s32.totalorder %s18, 0
    %p60 = por %p58, %p59
    %p61 = scmp.ne.s32.totalorder %s49, %s50
    %p62 = scmp.eq.s32.totalorder %s19, 3
    %p63 = por %p61, %p62
    %p65 = scmp.ne.s32.totalorder %s50, %s64
    %p66 = scmp.eq.s32.totalorder %s19, 0
    %p67 = por %p65, %p66
    %s69 = sadd.s32 %s68, 1
    %p72 = scmp.eq.s32.totalorder %s13, 3
    %p73 = scmp.ne.s32.totalorder %s68, %s70
    %p74 = scmp.eq.s32.totalorder %s13, 0
    %p75 = por %p73, %p74
    %p76 = scmp.ne.s32.totalorder %s68, %s70
    %p77 = scmp.eq.s32.totalorder %s18, 3
    %p78 = por %p76, %p77
    %p79 = scmp.ne.s32.totalorder %s70, %s71
    %p80 = scmp.eq.s32.totalorder %s18, 0
    %p81 = por %p79, %p80
    %p82 = scmp.ne.s32.totalorder %s70, %s71
    %p83 = scmp.eq.s32.totalorder %s19, 3
    %p84 = por %p82, %p83
    %p86 = scmp.ne.s32.totalorder %s71, %s85
    %p87 = scmp.eq.s32.totalorder %s19, 0
    %p88 = por %p86, %p87
    %s90 = sadd.s32 %s89, 1
    %p93 = scmp.eq.s32.totalorder %s13, 3
    %p94 = scmp.ne.s32.totalorder %s89, %s91
    %p95 = scmp.eq.s32.totalorder %s13, 0
    %p96 = por %p94, %p95
    %p97 = scmp.ne.s32.totalorder %s89, %s91
    %p98 = scmp.eq.s32.totalorder %s18, 3
    %p99 = por %p97, %p98
    %p100 = scmp.ne.s32.totalorder %s91, %s92
    %p101 = scmp.eq.s32.totalorder %s18, 0
    %p102 = por %p100, %p101
    %p103 = scmp.ne.s32.totalorder %s91, %s92
    %p104 = scmp.eq.s32.totalorder %s19, 3
    %p105 = por %p103, %p104
    %p107 = scmp.ne.s32.totalorder %s92, %s106
    %p108 = scmp.eq.s32.totalorder %s19, 0
    %p109 = por %p107, %p108
    %s111 = sadd.s32 %s110, 1
    %p114 = scmp.eq.s32.totalorder %s13, 3
    %p115 = scmp.ne.s32.totalorder %s110, %s112
    %p116 = scmp.eq.s32.totalorder %s13, 0
    %p117 = por %p115, %p116
    %p118 = scmp.ne.s32.totalorder %s110, %s112
    %p119 = scmp.eq.s32.totalorder %s18, 3
    %p120 = por %p118, %p119
    %p121 = scmp.ne.s32.totalorder %s112, %s113
    %p122 = scmp.eq.s32.totalorder %s18, 0
    %p123 = por %p121, %p122
    %p124 = scmp.ne.s32.totalorder %s112, %s113
    %p125 = scmp.eq.s32.totalorder %s19, 3
    %p126 = por %p124, %p125
    %p128 = scmp.ne.s32.totalorder %s113, %s127
    %p129 = scmp.eq.s32.totalorder %s19, 0
    %p130 = por %p128, %p129
    %s132 = sadd.s32 %s131, 1
    %p135 = scmp.eq.s32.totalorder %s13, 3
    %p136 = scmp.ne.s32.totalorder %s131, %s133
    %p137 = scmp.eq.s32.totalorder %s13, 0
    %p138 = por %p136, %p137
    %p139 = scmp.ne.s32.totalorder %s131, %s133
    %p140 = scmp.eq.s32.totalorder %s18, 3
    %p141 = por %p139, %p140
    %p142 = scmp.ne.s32.totalorder %s133, %s134
    %p143 = scmp.eq.s32.totalorder %s18, 0
    %p144 = por %p142, %p143
    %p145 = scmp.ne.s32.totalorder %s133, %s134
    %p146 = scmp.eq.s32.totalorder %s19, 3
    %p147 = por %p145, %p146
    %p149 = scmp.ne.s32.totalorder %s134, %s148
    %p150 = scmp.eq.s32.totalorder %s19, 0
    %p151 = por %p149, %p150
    %s153 = sadd.s32 %s152, 1
    %p156 = scmp.eq.s32.totalorder %s13, 3
    %p157 = scmp.ne.s32.totalorder %s152, %s154
    %p158 = scmp.eq.s32.totalorder %s13, 0
    %p159 = por %p157, %p158
    %p160 = scmp.ne.s32.totalorder %s152, %s154
    %p161 = scmp.eq.s32.totalorder %s18, 3
    %p162 = por %p160, %p161
    %p163 = scmp.ne.s32.totalorder %s154, %s155
    %p164 = scmp.eq.s32.totalorder %s18, 0
    %p165 = por %p163, %p164
    %p166 = scmp.ne.s32.totalorder %s154, %s155
    %p167 = scmp.eq.s32.totalorder %s19, 3
    %p168 = por %p166, %p167
    %p170 = scmp.ne.s32.totalorder %s155, %s169
    %p171 = scmp.eq.s32.totalorder %s19, 0
    %p172 = por %p170, %p171
    %s173 = ssub.s32 %s13, %s20
    %p174 = scmp.eq.s32.totalorder %s173, 0
    %s176 = sadd.s32 %s175, 1
    %s177 = scalar_select %p174, %s175, %s176
    %p180 = pneg %p174
    %p181 = scmp.eq.s32.totalorder %s13, 3
    %p182 = por %p180, %p181
    %p183 = scmp.ne.s32.totalorder %s175, %s178
    %p184 = scmp.eq.s32.totalorder %s13, 0
    %p185 = por %p183, %p184
    %p186 = scmp.ne.s32.totalorder %s175, %s178
    %p187 = scmp.eq.s32.totalorder %s18, 3
    %p188 = por %p186, %p187
    %p189 = scmp.ne.s32.totalorder %s178, %s179
    %p190 = scmp.eq.s32.totalorder %s18, 0
    %p191 = por %p189, %p190
    %p192 = scmp.ne.s32.totalorder %s178, %s179
    %p193 = scmp.eq.s32.totalorder %s19, 3
    %p194 = por %p192, %p193
    %p196 = scmp.ne.s32.totalorder %s179, %s195
    %p197 = scmp.eq.s32.totalorder %s19, 0
    %p198 = por %p196, %p197
    %p199 = scmp.le.s32.totalorder 1, %s13
    %p200 = scmp.lt.s32.totalorder %s13, 5
    %p201 = pnand %p199, %p200
    %p202 = pneg %p201
    // Predicated region
    $region9: #{tpu_custom_call.1} parent=5 // pred_check
      _
    $region10: #{tpu_custom_call.1} parent=5 // pred_check_branch
      %204 = sbr.rel (%p201) target = $region12
    $region11: #{tpu_custom_call.1} parent=5 // pred_region
      %s205 = ssub.s32 %s13, 1
      // Predicated region
      $region13: #{tpu_custom_call.1} parent=11 // pred_check
        %p206 = pneg %p60
      $region14: #{tpu_custom_call.1} parent=11 // pred_check_branch
        %208 = sbr.rel (%p206) target = $region16
      $region15: #{tpu_custom_call.1} parent=11 // pred_region
        _
      $region16: #{tpu_custom_call.1} parent=11 // pred_fallthru
        _
      // Predicated region
      $region17: #{tpu_custom_call.1} parent=11 // pred_check
        %p209 = pneg %p81
      $region18: #{tpu_custom_call.1} parent=11 // pred_check_branch
        %211 = sbr.rel (%p209) target = $region20
      $region19: #{tpu_custom_call.1} parent=11 // pred_region
        _
      $region20: #{tpu_custom_call.1} parent=11 // pred_fallthru
        _
      // Predicated region
      $region21: #{tpu_custom_call.1} parent=11 // pred_check
        %p212 = pneg %p102
      $region22: #{tpu_custom_call.1} parent=11 // pred_check_branch
        %214 = sbr.rel (%p212) target = $region24
      $region23: #{tpu_custom_call.1} parent=11 // pred_region
        _
      $region24: #{tpu_custom_call.1} parent=11 // pred_fallthru
        _
      // Predicated region
      $region25: #{tpu_custom_call.1} parent=11 // pred_check
        %p215 = pneg %p123
      $region26: #{tpu_custom_call.1} parent=11 // pred_check_branch
        %217 = sbr.rel (%p215) target = $region28
      $region27: #{tpu_custom_call.1} parent=11 // pred_region
        _
      $region28: #{tpu_custom_call.1} parent=11 // pred_fallthru
        _
      // Predicated region
      $region29: #{tpu_custom_call.1} parent=11 // pred_check
        %p218 = pneg %p144
      $region30: #{tpu_custom_call.1} parent=11 // pred_check_branch
        %220 = sbr.rel (%p218) target = $region32
      $region31: #{tpu_custom_call.1} parent=11 // pred_region
        _
      $region32: #{tpu_custom_call.1} parent=11 // pred_fallthru
        _
      // Predicated region
      $region33: #{tpu_custom_call.1} parent=11 // pred_check
        %p221 = pneg %p165
      $region34: #{tpu_custom_call.1} parent=11 // pred_check_branch
        %223 = sbr.rel (%p221) target = $region36
      $region35: #{tpu_custom_call.1} parent=11 // pred_region
        _
      $region36: #{tpu_custom_call.1} parent=11 // pred_fallthru
        _
    $region12: #{tpu_custom_call.1} parent=5 // pred_fallthru
      _
    %p224 = scmp.lt.s32.totalorder %s13, 4
    // Predicated region
    $region37: #{tpu_custom_call.1} parent=5 // pred_check
      %p225 = pneg %p224
    $region38: #{tpu_custom_call.1} parent=5 // pred_check_branch
      %227 = sbr.rel (%p225) target = $region40
    $region39: #{tpu_custom_call.1} parent=5 // pred_region
      // Predicated region
      $region41: #{tpu_custom_call.1} parent=39 // pred_check
        %p228 = pneg %p33
      $region42: #{tpu_custom_call.1} parent=39 // pred_check_branch
        %230 = sbr.rel (%p228) target = $region44
      $region43: #{tpu_custom_call.1} parent=39 // pred_region
        %s231 = smul.u32 32, %s13
        %p232 = scmp.lt.s32.totalorder %s231, 127
        %s233 = scalar_select %p232, %s231, 127
        %s234 = smul.addr %s233, 8
        %s235 = scalar_lea.vmem %s0, %s234
        %s236 = smul.u32 32, %s13
      $region44: #{tpu_custom_call.1} parent=39 // pred_fallthru
        _
    $region40: #{tpu_custom_call.1} parent=5 // pred_fallthru
      _
    %p237 = scmp.le.s32.totalorder 1, %s13
    %p238 = scmp.lt.s32.totalorder %s13, 5
    %p239 = pnand %p237, %p238
    %p240 = pneg %p239
    // Predicated region
    $region45: #{tpu_custom_call.1} parent=5 // pred_check
      _
    $region46: #{tpu_custom_call.1} parent=5 // pred_check_branch
      %242 = sbr.rel (%p239) target = $region48
    $region47: #{tpu_custom_call.1} parent=5 // pred_region
      %s243 = ssub.s32 %s13, 1
      %s244 = smul.u32 32, %s18
      %p245 = scmp.lt.s32.totalorder %s244, 127
      %s246 = scalar_select %p245, %s244, 127
      %s247 = smul.addr %s246, 8
      %s248 = scalar_lea.vmem %s0, %s247
      %p249 = pneg %p39
      %p250 = pneg %p36
      %p251 = pneg %p60
      %p252 = pneg %p57
      %p253 = pneg %p81
      %p254 = pneg %p78
      %p255 = pneg %p102
      %p256 = pneg %p99
      %p257 = pneg %p123
      %p258 = pneg %p120
      %p259 = pneg %p144
      %p260 = pneg %p141
      %p261 = pneg %p165
      %p262 = pneg %p162
      %p263 = pneg %p191
      %p264 = pneg %p188
      %s265 = smul.u32 32, %s18
      %p266 = scmp.lt.s32.totalorder %s265, 127
      %s267 = scalar_select %p266, %s265, 127
      %s268 = smul.addr %s267, 8
      %s269 = scalar_lea.vmem %s7, %s268
      %s270 = smul.u32 32, %s18
      %p271 = scmp.lt.s32.totalorder %s270, 127
      %s272 = scalar_select %p271, %s270, 127
      %s273 = smul.addr %s272, 8
      %s274 = scalar_lea.vmem %s0, %s273
      %s275 = smul.u32 32, %s18
      %s276 = smul.u32 32, %s18
      %p277 = scmp.lt.s32.totalorder %s276, 127
      %s278 = scalar_select %p277, %s276, 127
      %s279 = smul.addr %s278, 8
      %s280 = scalar_lea.vmem %s7, %s279
      %s281 = smul.u32 32, %s18
      %v282 = vld [vmem:[%s274] sm:$0xff]
      %v283 = vld [vmem:[%s274 + $0x8] sm:$0xff]
      %v284 = vld [vmem:[%s274 + $0x10] sm:$0xff]
      %v285 = vld [vmem:[%s274 + $0x18] sm:$0xff]
      %v286 = vld [vmem:[%s274 + $0x20] sm:$0xff]
      %v287 = vld [vmem:[%s274 + $0x28] sm:$0xff]
      %v288 = vld [vmem:[%s274 + $0x30] sm:$0xff]
      %v289 = vld [vmem:[%s274 + $0x38] sm:$0xff]
      %v290 = vld [vmem:[%s274 + $0x40] sm:$0xff]
      %v291 = vld [vmem:[%s274 + $0x48] sm:$0xff]
      %v292 = vld [vmem:[%s274 + $0x50] sm:$0xff]
      %v293 = vld [vmem:[%s274 + $0x58] sm:$0xff]
      %v294 = vld [vmem:[%s274 + $0x60] sm:$0xff]
      %v295 = vld [vmem:[%s274 + $0x68] sm:$0xff]
      %v296 = vld [vmem:[%s274 + $0x70] sm:$0xff]
      %v297 = vld [vmem:[%s274 + $0x78] sm:$0xff]
      %v298 = vld [vmem:[%s274 + $0x80] sm:$0xff]
      %v299 = vld [vmem:[%s274 + $0x88] sm:$0xff]
      %v300 = vld [vmem:[%s274 + $0x90] sm:$0xff]
      %v301 = vld [vmem:[%s274 + $0x98] sm:$0xff]
      %v302 = vld [vmem:[%s274 + $0xa0] sm:$0xff]
      %v303 = vld [vmem:[%s274 + $0xa8] sm:$0xff]
      %v304 = vld [vmem:[%s274 + $0xb0] sm:$0xff]
      %v305 = vld [vmem:[%s274 + $0xb8] sm:$0xff]
      %v306 = vld [vmem:[%s274 + $0xc0] sm:$0xff]
      %v307 = vld [vmem:[%s274 + $0xc8] sm:$0xff]
      %v308 = vld [vmem:[%s274 + $0xd0] sm:$0xff]
      %v309 = vld [vmem:[%s274 + $0xd8] sm:$0xff]
      %v310 = vld [vmem:[%s274 + $0xe0] sm:$0xff]
      %v311 = vld [vmem:[%s274 + $0xe8] sm:$0xff]
      %v312 = vld [vmem:[%s274 + $0xf0] sm:$0xff]
      %v313 = vld [vmem:[%s274 + $0xf8] sm:$0xff]
      %v314 = vld [vmem:[%s1] sm:$0x7]
      %v315 = vld [vmem:[%s2] sm:$0x1]
      %317 = vset.pattern.permute.xlu0 0
      %318 = vperm.xlu0 %317, %v282
      %v319 = vpop.permute.xlu0 %318
      %322 = vset.pattern.permute.xlu0 0
      %323 = vperm.xlu0 %322, %v283
      %v324 = vpop.permute.xlu0 %323
      %327 = vset.pattern.permute.xlu0 0
      %328 = vperm.xlu0 %327, %v284
      %v329 = vpop.permute.xlu0 %328
      %332 = vset.pattern.permute.xlu0 0
      %333 = vperm.xlu0 %332, %v285
      %v334 = vpop.permute.xlu0 %333
      %337 = vset.pattern.permute.xlu0 0
      %338 = vperm.xlu0 %337, %v286
      %v339 = vpop.permute.xlu0 %338
      %342 = vset.pattern.permute.xlu0 0
      %343 = vperm.xlu0 %342, %v287
      %v344 = vpop.permute.xlu0 %343
      %347 = vset.pattern.permute.xlu0 0
      %348 = vperm.xlu0 %347, %v288
      %v349 = vpop.permute.xlu0 %348
      %352 = vset.pattern.permute.xlu0 0
      %353 = vperm.xlu0 %352, %v289
      %v354 = vpop.permute.xlu0 %353
      %357 = vset.pattern.permute.xlu0 0
      %358 = vperm.xlu0 %357, %v290
      %v359 = vpop.permute.xlu0 %358
      %362 = vset.pattern.permute.xlu0 0
      %363 = vperm.xlu0 %362, %v291
      %v364 = vpop.permute.xlu0 %363
      %367 = vset.pattern.permute.xlu0 0
      %368 = vperm.xlu0 %367, %v292
      %v369 = vpop.permute.xlu0 %368
      %372 = vset.pattern.permute.xlu0 0
      %373 = vperm.xlu0 %372, %v293
      %v374 = vpop.permute.xlu0 %373
      %377 = vset.pattern.permute.xlu0 0
      %378 = vperm.xlu0 %377, %v294
      %v379 = vpop.permute.xlu0 %378
      %382 = vset.pattern.permute.xlu0 0
      %383 = vperm.xlu0 %382, %v295
      %v384 = vpop.permute.xlu0 %383
      %387 = vset.pattern.permute.xlu0 0
      %388 = vperm.xlu0 %387, %v296
      %v389 = vpop.permute.xlu0 %388
      %392 = vset.pattern.permute.xlu0 0
      %393 = vperm.xlu0 %392, %v297
      %v394 = vpop.permute.xlu0 %393
      %397 = vset.pattern.permute.xlu0 0
      %398 = vperm.xlu0 %397, %v298
      %v399 = vpop.permute.xlu0 %398
      %402 = vset.pattern.permute.xlu0 0
      %403 = vperm.xlu0 %402, %v299
      %v404 = vpop.permute.xlu0 %403
      %407 = vset.pattern.permute.xlu0 0
      %408 = vperm.xlu0 %407, %v300
      %v409 = vpop.permute.xlu0 %408
      %412 = vset.pattern.permute.xlu0 0
      %413 = vperm.xlu0 %412, %v301
      %v414 = vpop.permute.xlu0 %413
      %417 = vset.pattern.permute.xlu0 0
      %418 = vperm.xlu0 %417, %v302
      %v419 = vpop.permute.xlu0 %418
      %422 = vset.pattern.permute.xlu0 0
      %423 = vperm.xlu0 %422, %v303
      %v424 = vpop.permute.xlu0 %423
      %427 = vset.pattern.permute.xlu0 0
      %428 = vperm.xlu0 %427, %v304
      %v429 = vpop.permute.xlu0 %428
      %432 = vset.pattern.permute.xlu0 0
      %433 = vperm.xlu0 %432, %v305
      %v434 = vpop.permute.xlu0 %433
      %437 = vset.pattern.permute.xlu0 0
      %438 = vperm.xlu0 %437, %v306
      %v439 = vpop.permute.xlu0 %438
      %442 = vset.pattern.permute.xlu0 0
      %443 = vperm.xlu0 %442, %v307
      %v444 = vpop.permute.xlu0 %443
      %447 = vset.pattern.permute.xlu0 0
      %448 = vperm.xlu0 %447, %v308
      %v449 = vpop.permute.xlu0 %448
      %452 = vset.pattern.permute.xlu0 0
      %453 = vperm.xlu0 %452, %v309
      %v454 = vpop.permute.xlu0 %453
      %457 = vset.pattern.permute.xlu0 0
      %458 = vperm.xlu0 %457, %v310
      %v459 = vpop.permute.xlu0 %458
      %462 = vset.pattern.permute.xlu0 0
      %463 = vperm.xlu0 %462, %v311
      %v464 = vpop.permute.xlu0 %463
      %467 = vset.pattern.permute.xlu0 0
      %468 = vperm.xlu0 %467, %v312
      %v469 = vpop.permute.xlu0 %468
      %472 = vset.pattern.permute.xlu0 0
      %473 = vperm.xlu0 %472, %v313
      %v474 = vpop.permute.xlu0 %473
      %v476 = vperm.slane %v314, 0
      %v477 = vmul.f32 %v319, %v476
      %v478 = vmul.f32 %v324, %v476
      %v479 = vmul.f32 %v329, %v476
      %v480 = vmul.f32 %v334, %v476
      %v481 = vmul.f32 %v339, %v476
      %v482 = vmul.f32 %v344, %v476
      %v483 = vmul.f32 %v349, %v476
      %v484 = vmul.f32 %v354, %v476
      %v485 = vmul.f32 %v359, %v476
      %v486 = vmul.f32 %v364, %v476
      %v487 = vmul.f32 %v369, %v476
      %v488 = vmul.f32 %v374, %v476
      %v489 = vmul.f32 %v379, %v476
      %v490 = vmul.f32 %v384, %v476
      %v491 = vmul.f32 %v389, %v476
      %v492 = vmul.f32 %v394, %v476
      %v493 = vmul.f32 %v399, %v476
      %v494 = vmul.f32 %v404, %v476
      %v495 = vmul.f32 %v409, %v476
      %v496 = vmul.f32 %v414, %v476
      %v497 = vmul.f32 %v419, %v476
      %v498 = vmul.f32 %v424, %v476
      %v499 = vmul.f32 %v429, %v476
      %v500 = vmul.f32 %v434, %v476
      %v501 = vmul.f32 %v439, %v476
      %v502 = vmul.f32 %v444, %v476
      %v503 = vmul.f32 %v449, %v476
      %v504 = vmul.f32 %v454, %v476
      %v505 = vmul.f32 %v459, %v476
      %v506 = vmul.f32 %v464, %v476
      %v507 = vmul.f32 %v469, %v476
      %v508 = vmul.f32 %v474, %v476
      %509 = vset.pattern.permute.xlu0 1
      %510 = vperm.xlu0 %509, %v282
      %v511 = vpop.permute.xlu0 %510
      %513 = vset.pattern.permute.xlu0 1
      %514 = vperm.xlu0 %513, %v283
      %v515 = vpop.permute.xlu0 %514
      %517 = vset.pattern.permute.xlu0 1
      %518 = vperm.xlu0 %517, %v284
      %v519 = vpop.permute.xlu0 %518
      %521 = vset.pattern.permute.xlu0 1
      %522 = vperm.xlu0 %521, %v285
      %v523 = vpop.permute.xlu0 %522
      %525 = vset.pattern.permute.xlu0 1
      %526 = vperm.xlu0 %525, %v286
      %v527 = vpop.permute.xlu0 %526
      %529 = vset.pattern.permute.xlu0 1
      %530 = vperm.xlu0 %529, %v287
      %v531 = vpop.permute.xlu0 %530
      %533 = vset.pattern.permute.xlu0 1
      %534 = vperm.xlu0 %533, %v288
      %v535 = vpop.permute.xlu0 %534
      %537 = vset.pattern.permute.xlu0 1
      %538 = vperm.xlu0 %537, %v289
      %v539 = vpop.permute.xlu0 %538
      %541 = vset.pattern.permute.xlu0 1
      %542 = vperm.xlu0 %541, %v290
      %v543 = vpop.permute.xlu0 %542
      %545 = vset.pattern.permute.xlu0 1
      %546 = vperm.xlu0 %545, %v291
      %v547 = vpop.permute.xlu0 %546
      %549 = vset.pattern.permute.xlu0 1
      %550 = vperm.xlu0 %549, %v292
      %v551 = vpop.permute.xlu0 %550
      %553 = vset.pattern.permute.xlu0 1
      %554 = vperm.xlu0 %553, %v293
      %v555 = vpop.permute.xlu0 %554
      %557 = vset.pattern.permute.xlu0 1
      %558 = vperm.xlu0 %557, %v294
      %v559 = vpop.permute.xlu0 %558
      %561 = vset.pattern.permute.xlu0 1
      %562 = vperm.xlu0 %561, %v295
      %v563 = vpop.permute.xlu0 %562
      %565 = vset.pattern.permute.xlu0 1
      %566 = vperm.xlu0 %565, %v296
      %v567 = vpop.permute.xlu0 %566
      %569 = vset.pattern.permute.xlu0 1
      %570 = vperm.xlu0 %569, %v297
      %v571 = vpop.permute.xlu0 %570
      %573 = vset.pattern.permute.xlu0 1
      %574 = vperm.xlu0 %573, %v298
      %v575 = vpop.permute.xlu0 %574
      %577 = vset.pattern.permute.xlu0 1
      %578 = vperm.xlu0 %577, %v299
      %v579 = vpop.permute.xlu0 %578
      %581 = vset.pattern.permute.xlu0 1
      %582 = vperm.xlu0 %581, %v300
      %v583 = vpop.permute.xlu0 %582
      %585 = vset.pattern.permute.xlu0 1
      %586 = vperm.xlu0 %585, %v301
      %v587 = vpop.permute.xlu0 %586
      %589 = vset.pattern.permute.xlu0 1
      %590 = vperm.xlu0 %589, %v302
      %v591 = vpop.permute.xlu0 %590
      %593 = vset.pattern.permute.xlu0 1
      %594 = vperm.xlu0 %593, %v303
      %v595 = vpop.permute.xlu0 %594
      %597 = vset.pattern.permute.xlu0 1
      %598 = vperm.xlu0 %597, %v304
      %v599 = vpop.permute.xlu0 %598
      %601 = vset.pattern.permute.xlu0 1
      %602 = vperm.xlu0 %601, %v305
      %v603 = vpop.permute.xlu0 %602
      %605 = vset.pattern.permute.xlu0 1
      %606 = vperm.xlu0 %605, %v306
      %v607 = vpop.permute.xlu0 %606
      %609 = vset.pattern.permute.xlu0 1
      %610 = vperm.xlu0 %609, %v307
      %v611 = vpop.permute.xlu0 %610
      %613 = vset.pattern.permute.xlu0 1
      %614 = vperm.xlu0 %613, %v308
      %v615 = vpop.permute.xlu0 %614
      %617 = vset.pattern.permute.xlu0 1
      %618 = vperm.xlu0 %617, %v309
      %v619 = vpop.permute.xlu0 %618
      %621 = vset.pattern.permute.xlu0 1
      %622 = vperm.xlu0 %621, %v310
      %v623 = vpop.permute.xlu0 %622
      %625 = vset.pattern.permute.xlu0 1
      %626 = vperm.xlu0 %625, %v311
      %v627 = vpop.permute.xlu0 %626
      %629 = vset.pattern.permute.xlu0 1
      %630 = vperm.xlu0 %629, %v312
      %v631 = vpop.permute.xlu0 %630
      %633 = vset.pattern.permute.xlu0 1
      %634 = vperm.xlu0 %633, %v313
      %v635 = vpop.permute.xlu0 %634
      %v637 = vperm.slane %v314, 1
      %v638 = vmul.f32 %v511, %v637
      %v639 = vmul.f32 %v515, %v637
      %v640 = vmul.f32 %v519, %v637
      %v641 = vmul.f32 %v523, %v637
      %v642 = vmul.f32 %v527, %v637
      %v643 = vmul.f32 %v531, %v637
      %v644 = vmul.f32 %v535, %v637
      %v645 = vmul.f32 %v539, %v637
      %v646 = vmul.f32 %v543, %v637
      %v647 = vmul.f32 %v547, %v637
      %v648 = vmul.f32 %v551, %v637
      %v649 = vmul.f32 %v555, %v637
      %v650 = vmul.f32 %v559, %v637
      %v651 = vmul.f32 %v563, %v637
      %v652 = vmul.f32 %v567, %v637
      %v653 = vmul.f32 %v571, %v637
      %v654 = vmul.f32 %v575, %v637
      %v655 = vmul.f32 %v579, %v637
      %v656 = vmul.f32 %v583, %v637
      %v657 = vmul.f32 %v587, %v637
      %v658 = vmul.f32 %v591, %v637
      %v659 = vmul.f32 %v595, %v637
      %v660 = vmul.f32 %v599, %v637
      %v661 = vmul.f32 %v603, %v637
      %v662 = vmul.f32 %v607, %v637
      %v663 = vmul.f32 %v611, %v637
      %v664 = vmul.f32 %v615, %v637
      %v665 = vmul.f32 %v619, %v637
      %v666 = vmul.f32 %v623, %v637
      %v667 = vmul.f32 %v627, %v637
      %v668 = vmul.f32 %v631, %v637
      %v669 = vmul.f32 %v635, %v637
      %v670 = vadd.f32 %v477, %v638
      %v671 = vadd.f32 %v478, %v639
      %v672 = vadd.f32 %v479, %v640
      %v673 = vadd.f32 %v480, %v641
      %v674 = vadd.f32 %v481, %v642
      %v675 = vadd.f32 %v482, %v643
      %v676 = vadd.f32 %v483, %v644
      %v677 = vadd.f32 %v484, %v645
      %v678 = vadd.f32 %v485, %v646
      %v679 = vadd.f32 %v486, %v647
      %v680 = vadd.f32 %v487, %v648
      %v681 = vadd.f32 %v488, %v649
      %v682 = vadd.f32 %v489, %v650
      %v683 = vadd.f32 %v490, %v651
      %v684 = vadd.f32 %v491, %v652
      %v685 = vadd.f32 %v492, %v653
      %v686 = vadd.f32 %v493, %v654
      %v687 = vadd.f32 %v494, %v655
      %v688 = vadd.f32 %v495, %v656
      %v689 = vadd.f32 %v496, %v657
      %v690 = vadd.f32 %v497, %v658
      %v691 = vadd.f32 %v498, %v659
      %v692 = vadd.f32 %v499, %v660
      %v693 = vadd.f32 %v500, %v661
      %v694 = vadd.f32 %v501, %v662
      %v695 = vadd.f32 %v502, %v663
      %v696 = vadd.f32 %v503, %v664
      %v697 = vadd.f32 %v504, %v665
      %v698 = vadd.f32 %v505, %v666
      %v699 = vadd.f32 %v506, %v667
      %v700 = vadd.f32 %v507, %v668
      %v701 = vadd.f32 %v508, %v669
      %702 = vset.pattern.permute.xlu0 2
      %703 = vperm.xlu0 %702, %v282
      %v704 = vpop.permute.xlu0 %703
      %706 = vset.pattern.permute.xlu0 2
      %707 = vperm.xlu0 %706, %v283
      %v708 = vpop.permute.xlu0 %707
      %710 = vset.pattern.permute.xlu0 2
      %711 = vperm.xlu0 %710, %v284
      %v712 = vpop.permute.xlu0 %711
      %714 = vset.pattern.permute.xlu0 2
      %715 = vperm.xlu0 %714, %v285
      %v716 = vpop.permute.xlu0 %715
      %718 = vset.pattern.permute.xlu0 2
      %719 = vperm.xlu0 %718, %v286
      %v720 = vpop.permute.xlu0 %719
      %722 = vset.pattern.permute.xlu0 2
      %723 = vperm.xlu0 %722, %v287
      %v724 = vpop.permute.xlu0 %723
      %726 = vset.pattern.permute.xlu0 2
      %727 = vperm.xlu0 %726, %v288
      %v728 = vpop.permute.xlu0 %727
      %730 = vset.pattern.permute.xlu0 2
      %731 = vperm.xlu0 %730, %v289
      %v732 = vpop.permute.xlu0 %731
      %734 = vset.pattern.permute.xlu0 2
      %735 = vperm.xlu0 %734, %v290
      %v736 = vpop.permute.xlu0 %735
      %738 = vset.pattern.permute.xlu0 2
      %739 = vperm.xlu0 %738, %v291
      %v740 = vpop.permute.xlu0 %739
      %742 = vset.pattern.permute.xlu0 2
      %743 = vperm.xlu0 %742, %v292
      %v744 = vpop.permute.xlu0 %743
      %746 = vset.pattern.permute.xlu0 2
      %747 = vperm.xlu0 %746, %v293
      %v748 = vpop.permute.xlu0 %747
      %750 = vset.pattern.permute.xlu0 2
      %751 = vperm.xlu0 %750, %v294
      %v752 = vpop.permute.xlu0 %751
      %754 = vset.pattern.permute.xlu0 2
      %755 = vperm.xlu0 %754, %v295
      %v756 = vpop.permute.xlu0 %755
      %758 = vset.pattern.permute.xlu0 2
      %759 = vperm.xlu0 %758, %v296
      %v760 = vpop.permute.xlu0 %759
      %762 = vset.pattern.permute.xlu0 2
      %763 = vperm.xlu0 %762, %v297
      %v764 = vpop.permute.xlu0 %763
      %766 = vset.pattern.permute.xlu0 2
      %767 = vperm.xlu0 %766, %v298
      %v768 = vpop.permute.xlu0 %767
      %770 = vset.pattern.permute.xlu0 2
      %771 = vperm.xlu0 %770, %v299
      %v772 = vpop.permute.xlu0 %771
      %774 = vset.pattern.permute.xlu0 2
      %775 = vperm.xlu0 %774, %v300
      %v776 = vpop.permute.xlu0 %775
      %778 = vset.pattern.permute.xlu0 2
      %779 = vperm.xlu0 %778, %v301
      %v780 = vpop.permute.xlu0 %779
      %782 = vset.pattern.permute.xlu0 2
      %783 = vperm.xlu0 %782, %v302
      %v784 = vpop.permute.xlu0 %783
      %786 = vset.pattern.permute.xlu0 2
      %787 = vperm.xlu0 %786, %v303
      %v788 = vpop.permute.xlu0 %787
      %790 = vset.pattern.permute.xlu0 2
      %791 = vperm.xlu0 %790, %v304
      %v792 = vpop.permute.xlu0 %791
      %794 = vset.pattern.permute.xlu0 2
      %795 = vperm.xlu0 %794, %v305
      %v796 = vpop.permute.xlu0 %795
      %798 = vset.pattern.permute.xlu0 2
      %799 = vperm.xlu0 %798, %v306
      %v800 = vpop.permute.xlu0 %799
      %802 = vset.pattern.permute.xlu0 2
      %803 = vperm.xlu0 %802, %v307
      %v804 = vpop.permute.xlu0 %803
      %806 = vset.pattern.permute.xlu0 2
      %807 = vperm.xlu0 %806, %v308
      %v808 = vpop.permute.xlu0 %807
      %810 = vset.pattern.permute.xlu0 2
      %811 = vperm.xlu0 %810, %v309
      %v812 = vpop.permute.xlu0 %811
      %814 = vset.pattern.permute.xlu0 2
      %815 = vperm.xlu0 %814, %v310
      %v816 = vpop.permute.xlu0 %815
      %818 = vset.pattern.permute.xlu0 2
      %819 = vperm.xlu0 %818, %v311
      %v820 = vpop.permute.xlu0 %819
      %822 = vset.pattern.permute.xlu0 2
      %823 = vperm.xlu0 %822, %v312
      %v824 = vpop.permute.xlu0 %823
      %826 = vset.pattern.permute.xlu0 2
      %827 = vperm.xlu0 %826, %v313
      %v828 = vpop.permute.xlu0 %827
      %v830 = vperm.slane %v314, 2
      %v831 = vmul.f32 %v704, %v830
      %v832 = vmul.f32 %v708, %v830
      %v833 = vmul.f32 %v712, %v830
      %v834 = vmul.f32 %v716, %v830
      %v835 = vmul.f32 %v720, %v830
      %v836 = vmul.f32 %v724, %v830
      %v837 = vmul.f32 %v728, %v830
      %v838 = vmul.f32 %v732, %v830
      %v839 = vmul.f32 %v736, %v830
      %v840 = vmul.f32 %v740, %v830
      %v841 = vmul.f32 %v744, %v830
      %v842 = vmul.f32 %v748, %v830
      %v843 = vmul.f32 %v752, %v830
      %v844 = vmul.f32 %v756, %v830
      %v845 = vmul.f32 %v760, %v830
      %v846 = vmul.f32 %v764, %v830
      %v847 = vmul.f32 %v768, %v830
      %v848 = vmul.f32 %v772, %v830
      %v849 = vmul.f32 %v776, %v830
      %v850 = vmul.f32 %v780, %v830
      %v851 = vmul.f32 %v784, %v830
      %v852 = vmul.f32 %v788, %v830
      %v853 = vmul.f32 %v792, %v830
      %v854 = vmul.f32 %v796, %v830
      %v855 = vmul.f32 %v800, %v830
      %v856 = vmul.f32 %v804, %v830
      %v857 = vmul.f32 %v808, %v830
      %v858 = vmul.f32 %v812, %v830
      %v859 = vmul.f32 %v816, %v830
      %v860 = vmul.f32 %v820, %v830
      %v861 = vmul.f32 %v824, %v830
      %v862 = vmul.f32 %v828, %v830
      %v863 = vadd.f32 %v670, %v831
      %v864 = vadd.f32 %v671, %v832
      %v865 = vadd.f32 %v672, %v833
      %v866 = vadd.f32 %v673, %v834
      %v867 = vadd.f32 %v674, %v835
      %v868 = vadd.f32 %v675, %v836
      %v869 = vadd.f32 %v676, %v837
      %v870 = vadd.f32 %v677, %v838
      %v871 = vadd.f32 %v678, %v839
      %v872 = vadd.f32 %v679, %v840
      %v873 = vadd.f32 %v680, %v841
      %v874 = vadd.f32 %v681, %v842
      %v875 = vadd.f32 %v682, %v843
      %v876 = vadd.f32 %v683, %v844
      %v877 = vadd.f32 %v684, %v845
      %v878 = vadd.f32 %v685, %v846
      %v879 = vadd.f32 %v686, %v847
      %v880 = vadd.f32 %v687, %v848
      %v881 = vadd.f32 %v688, %v849
      %v882 = vadd.f32 %v689, %v850
      %v883 = vadd.f32 %v690, %v851
      %v884 = vadd.f32 %v691, %v852
      %v885 = vadd.f32 %v692, %v853
      %v886 = vadd.f32 %v693, %v854
      %v887 = vadd.f32 %v694, %v855
      %v888 = vadd.f32 %v695, %v856
      %v889 = vadd.f32 %v696, %v857
      %v890 = vadd.f32 %v697, %v858
      %v891 = vadd.f32 %v698, %v859
      %v892 = vadd.f32 %v699, %v860
      %v893 = vadd.f32 %v700, %v861
      %v894 = vadd.f32 %v701, %v862
      %v896 = vperm.slane %v315, 0
      %v898 = vadd.f32 %v863, %v896
      %v899 = vadd.f32 %v864, %v896
      %v900 = vadd.f32 %v865, %v896
      %v901 = vadd.f32 %v866, %v896
      %v902 = vadd.f32 %v867, %v896
      %v903 = vadd.f32 %v868, %v896
      %v904 = vadd.f32 %v869, %v896
      %v905 = vadd.f32 %v870, %v896
      %v906 = vadd.f32 %v871, %v896
      %v907 = vadd.f32 %v872, %v896
      %v908 = vadd.f32 %v873, %v896
      %v909 = vadd.f32 %v874, %v896
      %v910 = vadd.f32 %v875, %v896
      %v911 = vadd.f32 %v876, %v896
      %v912 = vadd.f32 %v877, %v896
      %v913 = vadd.f32 %v878, %v896
      %v914 = vadd.f32 %v879, %v896
      %v915 = vadd.f32 %v880, %v896
      %v916 = vadd.f32 %v881, %v896
      %v917 = vadd.f32 %v882, %v896
      %v918 = vadd.f32 %v883, %v896
      %v919 = vadd.f32 %v884, %v896
      %v920 = vadd.f32 %v885, %v896
      %v921 = vadd.f32 %v886, %v896
      %v922 = vadd.f32 %v887, %v896
      %v923 = vadd.f32 %v888, %v896
      %v924 = vadd.f32 %v889, %v896
      %v925 = vadd.f32 %v890, %v896
      %v926 = vadd.f32 %v891, %v896
      %v927 = vadd.f32 %v892, %v896
      %v928 = vadd.f32 %v893, %v896
      %v929 = vadd.f32 %v894, %v896
      %v930 = vtanh.pop %v898
      %v931 = vtanh.pop %v899
      %v932 = vtanh.pop %v900
      %v933 = vtanh.pop %v901
      %v934 = vtanh.pop %v902
      %v935 = vtanh.pop %v903
      %v936 = vtanh.pop %v904
      %v937 = vtanh.pop %v905
      %v938 = vtanh.pop %v906
      %v939 = vtanh.pop %v907
      %v940 = vtanh.pop %v908
      %v941 = vtanh.pop %v909
      %v942 = vtanh.pop %v910
      %v943 = vtanh.pop %v911
      %v944 = vtanh.pop %v912
      %v945 = vtanh.pop %v913
      %v946 = vtanh.pop %v914
      %v947 = vtanh.pop %v915
      %v948 = vtanh.pop %v916
      %v949 = vtanh.pop %v917
      %v950 = vtanh.pop %v918
      %v951 = vtanh.pop %v919
      %v952 = vtanh.pop %v920
      %v953 = vtanh.pop %v921
      %v954 = vtanh.pop %v922
      %v955 = vtanh.pop %v923
      %v956 = vtanh.pop %v924
      %v957 = vtanh.pop %v925
      %v958 = vtanh.pop %v926
      %v959 = vtanh.pop %v927
      %v960 = vtanh.pop %v928
      %v961 = vtanh.pop %v929
      %v962 = vpack.c.bf16 %v931, %v930
      %v963 = vpack.c.bf16 %v933, %v932
      %v964 = vpack.c.bf16 %v935, %v934
      %v965 = vpack.c.bf16 %v937, %v936
      %v966 = vpack.c.bf16 %v939, %v938
      %v967 = vpack.c.bf16 %v941, %v940
      %v968 = vpack.c.bf16 %v943, %v942
      %v969 = vpack.c.bf16 %v945, %v944
      %v970 = vpack.c.bf16 %v947, %v946
      %v971 = vpack.c.bf16 %v949, %v948
      %v972 = vpack.c.bf16 %v951, %v950
      %v973 = vpack.c.bf16 %v953, %v952
      %v974 = vpack.c.bf16 %v955, %v954
      %v975 = vpack.c.bf16 %v957, %v956
      %v976 = vpack.c.bf16 %v959, %v958
      %v977 = vpack.c.bf16 %v961, %v960
      %v978 = vld [vmem:[%s3] sm:$0xf]
      %v979 = vld [vmem:[%s3 + $0x4] sm:$0xf]
      %v980 = vld [vmem:[%s3 + $0x8] sm:$0xf]
      %v981 = vld [vmem:[%s3 + $0xc] sm:$0xf]
      %v982 = vld [vmem:[%s3 + $0x10] sm:$0xf]
      %v983 = vld [vmem:[%s3 + $0x14] sm:$0xf]
      %v984 = vld [vmem:[%s3 + $0x18] sm:$0xf]
      %v985 = vld [vmem:[%s3 + $0x1c] sm:$0xf]
      %v986 = vld [vmem:[%s3 + $0x20] sm:$0xf]
      %v987 = vld [vmem:[%s3 + $0x24] sm:$0xf]
      %v988 = vld [vmem:[%s3 + $0x28] sm:$0xf]
      %v989 = vld [vmem:[%s3 + $0x2c] sm:$0xf]
      %v990 = vld [vmem:[%s3 + $0x30] sm:$0xf]
      %v991 = vld [vmem:[%s3 + $0x34] sm:$0xf]
      %v992 = vld [vmem:[%s3 + $0x38] sm:$0xf]
      %v993 = vld [vmem:[%s3 + $0x3c] sm:$0xf]
      %v994 = vld [vmem:[%s4] sm:$0x1]
      %v996 = vperm.slane %v994, 0
      %v1014 = vunpack.c.l.b16 %v978
      %v1015 = vunpack.c.l.b16 %v979
      %v1016 = vunpack.c.l.b16 %v980
      %v1017 = vunpack.c.l.b16 %v981
      %v1018 = vunpack.c.l.b16 %v982
      %v1019 = vunpack.c.l.b16 %v983
      %v1020 = vunpack.c.l.b16 %v984
      %v1021 = vunpack.c.l.b16 %v985
      %v1022 = vunpack.c.l.b16 %v986
      %v1023 = vunpack.c.l.b16 %v987
      %v1024 = vunpack.c.l.b16 %v988
      %v1025 = vunpack.c.l.b16 %v989
      %v1026 = vunpack.c.l.b16 %v990
      %v1027 = vunpack.c.l.b16 %v991
      %v1028 = vunpack.c.l.b16 %v992
      %v1029 = vunpack.c.l.b16 %v993
      %v1030 = vpack.c.b16 %v1015, %v1014
      %v1031 = vpack.c.b16 %v1017, %v1016
      %v1032 = vpack.c.b16 %v1019, %v1018
      %v1033 = vpack.c.b16 %v1021, %v1020
      %v1034 = vpack.c.b16 %v1023, %v1022
      %v1035 = vpack.c.b16 %v1025, %v1024
      %v1036 = vpack.c.b16 %v1027, %v1026
      %v1037 = vpack.c.b16 %v1029, %v1028
      %1046 = vmatpush.bf16.msra.mxu0 %v1037
      %1047 = vmatpush.bf16.msra.mxu0 %v1036
      %1048 = vmatpush.bf16.msra.mxu0 %v1035
      %1049 = vmatpush.bf16.msra.mxu0 %v1034
      %1050 = vmatpush.bf16.msra.mxu0 %v1033
      %1051 = vmatpush.bf16.msra.mxu0 %v1032
      %1052 = vmatpush.bf16.msra.mxu0 %v1031
      %1053 = vmatpush.bf16.msra.mxu0 %v1030
      %1054 = vmatmul.bf16.gmra.mxu0 %v962
      %v1055 = vpop.f32.mrf.mxu0
      %v1056 = vadd.f32 %v996, %v1055
      %v1057 = vpop.f32.mrf.mxu0
      %v1058 = vadd.f32 %v996, %v1057
      %1059 = vmatmul.bf16.gmra.mxu0 %v963
      %v1060 = vpop.f32.mrf.mxu0
      %v1061 = vadd.f32 %v996, %v1060
      %v1062 = vpop.f32.mrf.mxu0
      %v1063 = vadd.f32 %v996, %v1062
      %1064 = vmatmul.bf16.gmra.mxu0 %v964
      %v1065 = vpop.f32.mrf.mxu0
      %v1066 = vadd.f32 %v996, %v1065
      %v1067 = vpop.f32.mrf.mxu0
      %v1068 = vadd.f32 %v996, %v1067
      %1069 = vmatmul.bf16.gmra.mxu0 %v965
      %v1070 = vpop.f32.mrf.mxu0
      %v1071 = vadd.f32 %v996, %v1070
      %v1072 = vpop.f32.mrf.mxu0
      %v1073 = vadd.f32 %v996, %v1072
      %1074 = vmatmul.bf16.gmra.mxu0 %v966
      %v1075 = vpop.f32.mrf.mxu0
      %v1076 = vadd.f32 %v996, %v1075
      %v1077 = vpop.f32.mrf.mxu0
      %v1078 = vadd.f32 %v996, %v1077
      %1079 = vmatmul.bf16.gmra.mxu0 %v967
      %v1080 = vpop.f32.mrf.mxu0
      %v1081 = vadd.f32 %v996, %v1080
      %v1082 = vpop.f32.mrf.mxu0
      %v1083 = vadd.f32 %v996, %v1082
      %1084 = vmatmul.bf16.gmra.mxu0 %v968
      %v1085 = vpop.f32.mrf.mxu0
      %v1086 = vadd.f32 %v996, %v1085
      %v1087 = vpop.f32.mrf.mxu0
      %v1088 = vadd.f32 %v996, %v1087
      %1089 = vmatmul.bf16.gmra.mxu0 %v969
      %v1090 = vpop.f32.mrf.mxu0
      %v1091 = vadd.f32 %v996, %v1090
      %v1092 = vpop.f32.mrf.mxu0
      %v1093 = vadd.f32 %v996, %v1092
      %1094 = vdwg.mxu0
      %v1095 = vtanh.pop %v1056
      %v1096 = vtanh.pop %v1058
      %v1097 = vtanh.pop %v1061
      %v1098 = vtanh.pop %v1063
      %v1099 = vtanh.pop %v1066
      %v1100 = vtanh.pop %v1068
      %v1101 = vtanh.pop %v1071
      %v1102 = vtanh.pop %v1073
      %v1103 = vtanh.pop %v1076
      %v1104 = vtanh.pop %v1078
      %v1105 = vtanh.pop %v1081
      %v1106 = vtanh.pop %v1083
      %v1107 = vtanh.pop %v1086
      %v1108 = vtanh.pop %v1088
      %v1109 = vtanh.pop %v1091
      %v1110 = vtanh.pop %v1093
      %v1111 = vpack.c.bf16 %v1096, %v1095
      %v1112 = vpack.c.bf16 %v1098, %v1097
      %v1113 = vpack.c.bf16 %v1100, %v1099
      %v1114 = vpack.c.bf16 %v1102, %v1101
      %v1115 = vpack.c.bf16 %v1104, %v1103
      %v1116 = vpack.c.bf16 %v1106, %v1105
      %v1117 = vpack.c.bf16 %v1108, %v1107
      %v1118 = vpack.c.bf16 %v1110, %v1109
      %1119 = vmatpush.bf16.msra.mxu0 %v1037
      %1120 = vmatpush.bf16.msra.mxu0 %v1036
      %1121 = vmatpush.bf16.msra.mxu0 %v1035
      %1122 = vmatpush.bf16.msra.mxu0 %v1034
      %1123 = vmatpush.bf16.msra.mxu0 %v1033
      %1124 = vmatpush.bf16.msra.mxu0 %v1032
      %1125 = vmatpush.bf16.msra.mxu0 %v1031
      %1126 = vmatpush.bf16.msra.mxu0 %v1030
      %1127 = vmatmul.bf16.gmra.mxu0 %v970
      %v1128 = vpop.f32.mrf.mxu0
      %v1129 = vadd.f32 %v996, %v1128
      %v1130 = vpop.f32.mrf.mxu0
      %v1131 = vadd.f32 %v996, %v1130
      %1132 = vmatmul.bf16.gmra.mxu0 %v971
      %v1133 = vpop.f32.mrf.mxu0
      %v1134 = vadd.f32 %v996, %v1133
      %v1135 = vpop.f32.mrf.mxu0
      %v1136 = vadd.f32 %v996, %v1135
      %1137 = vmatmul.bf16.gmra.mxu0 %v972
      %v1138 = vpop.f32.mrf.mxu0
      %v1139 = vadd.f32 %v996, %v1138
      %v1140 = vpop.f32.mrf.mxu0
      %v1141 = vadd.f32 %v996, %v1140
      %1142 = vmatmul.bf16.gmra.mxu0 %v973
      %v1143 = vpop.f32.mrf.mxu0
      %v1144 = vadd.f32 %v996, %v1143
      %v1145 = vpop.f32.mrf.mxu0
      %v1146 = vadd.f32 %v996, %v1145
      %1147 = vmatmul.bf16.gmra.mxu0 %v974
      %v1148 = vpop.f32.mrf.mxu0
      %v1149 = vadd.f32 %v996, %v1148
      %v1150 = vpop.f32.mrf.mxu0
      %v1151 = vadd.f32 %v996, %v1150
      %1152 = vmatmul.bf16.gmra.mxu0 %v975
      %v1153 = vpop.f32.mrf.mxu0
      %v1154 = vadd.f32 %v996, %v1153
      %v1155 = vpop.f32.mrf.mxu0
      %v1156 = vadd.f32 %v996, %v1155
      %1157 = vmatmul.bf16.gmra.mxu0 %v976
      %v1158 = vpop.f32.mrf.mxu0
      %v1159 = vadd.f32 %v996, %v1158
      %v1160 = vpop.f32.mrf.mxu0
      %v1161 = vadd.f32 %v996, %v1160
      %1162 = vmatmul.bf16.gmra.mxu0 %v977
      %v1163 = vpop.f32.mrf.mxu0
      %v1164 = vadd.f32 %v996, %v1163
      %v1165 = vpop.f32.mrf.mxu0
      %v1166 = vadd.f32 %v996, %v1165
      %1167 = vdwg.mxu0
      %v1168 = vtanh.pop %v1129
      %v1169 = vtanh.pop %v1131
      %v1170 = vtanh.pop %v1134
      %v1171 = vtanh.pop %v1136
      %v1172 = vtanh.pop %v1139
      %v1173 = vtanh.pop %v1141
      %v1174 = vtanh.pop %v1144
      %v1175 = vtanh.pop %v1146
      %v1176 = vtanh.pop %v1149
      %v1177 = vtanh.pop %v1151
      %v1178 = vtanh.pop %v1154
      %v1179 = vtanh.pop %v1156
      %v1180 = vtanh.pop %v1159
      %v1181 = vtanh.pop %v1161
      %v1182 = vtanh.pop %v1164
      %v1183 = vtanh.pop %v1166
      %v1184 = vpack.c.bf16 %v1169, %v1168
      %v1185 = vpack.c.bf16 %v1171, %v1170
      %v1186 = vpack.c.bf16 %v1173, %v1172
      %v1187 = vpack.c.bf16 %v1175, %v1174
      %v1188 = vpack.c.bf16 %v1177, %v1176
      %v1189 = vpack.c.bf16 %v1179, %v1178
      %v1190 = vpack.c.bf16 %v1181, %v1180
      %v1191 = vpack.c.bf16 %v1183, %v1182
      %s1192 = scalar_lea.vmem %s3, 64
      %v1193 = vld [vmem:[%s1192] sm:$0xf]
      %v1194 = vld [vmem:[%s1192 + $0x4] sm:$0xf]
      %v1195 = vld [vmem:[%s1192 + $0x8] sm:$0xf]
      %v1196 = vld [vmem:[%s1192 + $0xc] sm:$0xf]
      %v1197 = vld [vmem:[%s1192 + $0x10] sm:$0xf]
      %v1198 = vld [vmem:[%s1192 + $0x14] sm:$0xf]
      %v1199 = vld [vmem:[%s1192 + $0x18] sm:$0xf]
      %v1200 = vld [vmem:[%s1192 + $0x1c] sm:$0xf]
      %v1201 = vld [vmem:[%s1192 + $0x20] sm:$0xf]
      %v1202 = vld [vmem:[%s1192 + $0x24] sm:$0xf]
      %v1203 = vld [vmem:[%s1192 + $0x28] sm:$0xf]
      %v1204 = vld [vmem:[%s1192 + $0x2c] sm:$0xf]
      %v1205 = vld [vmem:[%s1192 + $0x30] sm:$0xf]
      %v1206 = vld [vmem:[%s1192 + $0x34] sm:$0xf]
      %v1207 = vld [vmem:[%s1192 + $0x38] sm:$0xf]
      %v1208 = vld [vmem:[%s1192 + $0x3c] sm:$0xf]
      %s1209 = scalar_lea.vmem %s4, 1
      %v1210 = vld [vmem:[%s1209] sm:$0x1]
      %v1212 = vperm.slane %v1210, 0
      %v1230 = vunpack.c.l.b16 %v1193
      %v1231 = vunpack.c.l.b16 %v1194
      %v1232 = vunpack.c.l.b16 %v1195
      %v1233 = vunpack.c.l.b16 %v1196
      %v1234 = vunpack.c.l.b16 %v1197
      %v1235 = vunpack.c.l.b16 %v1198
      %v1236 = vunpack.c.l.b16 %v1199
      %v1237 = vunpack.c.l.b16 %v1200
      %v1238 = vunpack.c.l.b16 %v1201
      %v1239 = vunpack.c.l.b16 %v1202
      %v1240 = vunpack.c.l.b16 %v1203
      %v1241 = vunpack.c.l.b16 %v1204
      %v1242 = vunpack.c.l.b16 %v1205
      %v1243 = vunpack.c.l.b16 %v1206
      %v1244 = vunpack.c.l.b16 %v1207
      %v1245 = vunpack.c.l.b16 %v1208
      %v1246 = vpack.c.b16 %v1231, %v1230
      %v1247 = vpack.c.b16 %v1233, %v1232
      %v1248 = vpack.c.b16 %v1235, %v1234
      %v1249 = vpack.c.b16 %v1237, %v1236
      %v1250 = vpack.c.b16 %v1239, %v1238
      %v1251 = vpack.c.b16 %v1241, %v1240
      %v1252 = vpack.c.b16 %v1243, %v1242
      %v1253 = vpack.c.b16 %v1245, %v1244
      %1262 = vmatpush.bf16.msra.mxu0 %v1253
      %1263 = vmatpush.bf16.msra.mxu0 %v1252
      %1264 = vmatpush.bf16.msra.mxu0 %v1251
      %1265 = vmatpush.bf16.msra.mxu0 %v1250
      %1266 = vmatpush.bf16.msra.mxu0 %v1249
      %1267 = vmatpush.bf16.msra.mxu0 %v1248
      %1268 = vmatpush.bf16.msra.mxu0 %v1247
      %1269 = vmatpush.bf16.msra.mxu0 %v1246
      %1270 = vmatmul.bf16.gmra.mxu0 %v1111
      %v1271 = vpop.f32.mrf.mxu0
      %v1272 = vadd.f32 %v1212, %v1271
      %v1273 = vpop.f32.mrf.mxu0
      %v1274 = vadd.f32 %v1212, %v1273
      %1275 = vmatmul.bf16.gmra.mxu0 %v1112
      %v1276 = vpop.f32.mrf.mxu0
      %v1277 = vadd.f32 %v1212, %v1276
      %v1278 = vpop.f32.mrf.mxu0
      %v1279 = vadd.f32 %v1212, %v1278
      %1280 = vmatmul.bf16.gmra.mxu0 %v1113
      %v1281 = vpop.f32.mrf.mxu0
      %v1282 = vadd.f32 %v1212, %v1281
      %v1283 = vpop.f32.mrf.mxu0
      %v1284 = vadd.f32 %v1212, %v1283
      %1285 = vmatmul.bf16.gmra.mxu0 %v1114
      %v1286 = vpop.f32.mrf.mxu0
      %v1287 = vadd.f32 %v1212, %v1286
      %v1288 = vpop.f32.mrf.mxu0
      %v1289 = vadd.f32 %v1212, %v1288
      %1290 = vmatmul.bf16.gmra.mxu0 %v1115
      %v1291 = vpop.f32.mrf.mxu0
      %v1292 = vadd.f32 %v1212, %v1291
      %v1293 = vpop.f32.mrf.mxu0
      %v1294 = vadd.f32 %v1212, %v1293
      %1295 = vmatmul.bf16.gmra.mxu0 %v1116
      %v1296 = vpop.f32.mrf.mxu0
      %v1297 = vadd.f32 %v1212, %v1296
      %v1298 = vpop.f32.mrf.mxu0
      %v1299 = vadd.f32 %v1212, %v1298
      %1300 = vmatmul.bf16.gmra.mxu0 %v1117
      %v1301 = vpop.f32.mrf.mxu0
      %v1302 = vadd.f32 %v1212, %v1301
      %v1303 = vpop.f32.mrf.mxu0
      %v1304 = vadd.f32 %v1212, %v1303
      %1305 = vmatmul.bf16.gmra.mxu0 %v1118
      %v1306 = vpop.f32.mrf.mxu0
      %v1307 = vadd.f32 %v1212, %v1306
      %v1308 = vpop.f32.mrf.mxu0
      %v1309 = vadd.f32 %v1212, %v1308
      %1310 = vdwg.mxu0
      %v1311 = vtanh.pop %v1272
      %v1312 = vtanh.pop %v1274
      %v1313 = vtanh.pop %v1277
      %v1314 = vtanh.pop %v1279
      %v1315 = vtanh.pop %v1282
      %v1316 = vtanh.pop %v1284
      %v1317 = vtanh.pop %v1287
      %v1318 = vtanh.pop %v1289
      %v1319 = vtanh.pop %v1292
      %v1320 = vtanh.pop %v1294
      %v1321 = vtanh.pop %v1297
      %v1322 = vtanh.pop %v1299
      %v1323 = vtanh.pop %v1302
      %v1324 = vtanh.pop %v1304
      %v1325 = vtanh.pop %v1307
      %v1326 = vtanh.pop %v1309
      %v1327 = vpack.c.bf16 %v1312, %v1311
      %v1328 = vpack.c.bf16 %v1314, %v1313
      %v1329 = vpack.c.bf16 %v1316, %v1315
      %v1330 = vpack.c.bf16 %v1318, %v1317
      %v1331 = vpack.c.bf16 %v1320, %v1319
      %v1332 = vpack.c.bf16 %v1322, %v1321
      %v1333 = vpack.c.bf16 %v1324, %v1323
      %v1334 = vpack.c.bf16 %v1326, %v1325
      %1335 = vmatpush.bf16.msra.mxu0 %v1253
      %1336 = vmatpush.bf16.msra.mxu0 %v1252
      %1337 = vmatpush.bf16.msra.mxu0 %v1251
      %1338 = vmatpush.bf16.msra.mxu0 %v1250
      %1339 = vmatpush.bf16.msra.mxu0 %v1249
      %1340 = vmatpush.bf16.msra.mxu0 %v1248
      %1341 = vmatpush.bf16.msra.mxu0 %v1247
      %1342 = vmatpush.bf16.msra.mxu0 %v1246
      %1343 = vmatmul.bf16.gmra.mxu0 %v1184
      %v1344 = vpop.f32.mrf.mxu0
      %v1345 = vadd.f32 %v1212, %v1344
      %v1346 = vpop.f32.mrf.mxu0
      %v1347 = vadd.f32 %v1212, %v1346
      %1348 = vmatmul.bf16.gmra.mxu0 %v1185
      %v1349 = vpop.f32.mrf.mxu0
      %v1350 = vadd.f32 %v1212, %v1349
      %v1351 = vpop.f32.mrf.mxu0
      %v1352 = vadd.f32 %v1212, %v1351
      %1353 = vmatmul.bf16.gmra.mxu0 %v1186
      %v1354 = vpop.f32.mrf.mxu0
      %v1355 = vadd.f32 %v1212, %v1354
      %v1356 = vpop.f32.mrf.mxu0
      %v1357 = vadd.f32 %v1212, %v1356
      %1358 = vmatmul.bf16.gmra.mxu0 %v1187
      %v1359 = vpop.f32.mrf.mxu0
      %v1360 = vadd.f32 %v1212, %v1359
      %v1361 = vpop.f32.mrf.mxu0
      %v1362 = vadd.f32 %v1212, %v1361
      %1363 = vmatmul.bf16.gmra.mxu0 %v1188
      %v1364 = vpop.f32.mrf.mxu0
      %v1365 = vadd.f32 %v1212, %v1364
      %v1366 = vpop.f32.mrf.mxu0
      %v1367 = vadd.f32 %v1212, %v1366
      %1368 = vmatmul.bf16.gmra.mxu0 %v1189
      %v1369 = vpop.f32.mrf.mxu0
      %v1370 = vadd.f32 %v1212, %v1369
      %v1371 = vpop.f32.mrf.mxu0
      %v1372 = vadd.f32 %v1212, %v1371
      %1373 = vmatmul.bf16.gmra.mxu0 %v1190
      %v1374 = vpop.f32.mrf.mxu0
      %v1375 = vadd.f32 %v1212, %v1374
      %v1376 = vpop.f32.mrf.mxu0
      %v1377 = vadd.f32 %v1212, %v1376
      %1378 = vmatmul.bf16.gmra.mxu0 %v1191
      %v1379 = vpop.f32.mrf.mxu0
      %v1380 = vadd.f32 %v1212, %v1379
      %v1381 = vpop.f32.mrf.mxu0
      %v1382 = vadd.f32 %v1212, %v1381
      %1383 = vdwg.mxu0
      %v1384 = vtanh.pop %v1345
      %v1385 = vtanh.pop %v1347
      %v1386 = vtanh.pop %v1350
      %v1387 = vtanh.pop %v1352
      %v1388 = vtanh.pop %v1355
      %v1389 = vtanh.pop %v1357
      %v1390 = vtanh.pop %v1360
      %v1391 = vtanh.pop %v1362
      %v1392 = vtanh.pop %v1365
      %v1393 = vtanh.pop %v1367
      %v1394 = vtanh.pop %v1370
      %v1395 = vtanh.pop %v1372
      %v1396 = vtanh.pop %v1375
      %v1397 = vtanh.pop %v1377
      %v1398 = vtanh.pop %v1380
      %v1399 = vtanh.pop %v1382
      %v1400 = vpack.c.bf16 %v1385, %v1384
      %v1401 = vpack.c.bf16 %v1387, %v1386
      %v1402 = vpack.c.bf16 %v1389, %v1388
      %v1403 = vpack.c.bf16 %v1391, %v1390
      %v1404 = vpack.c.bf16 %v1393, %v1392
      %v1405 = vpack.c.bf16 %v1395, %v1394
      %v1406 = vpack.c.bf16 %v1397, %v1396
      %v1407 = vpack.c.bf16 %v1399, %v1398
      %s1408 = scalar_lea.vmem %s3, 128
      %v1409 = vld [vmem:[%s1408] sm:$0xf]
      %v1410 = vld [vmem:[%s1408 + $0x4] sm:$0xf]
      %v1411 = vld [vmem:[%s1408 + $0x8] sm:$0xf]
      %v1412 = vld [vmem:[%s1408 + $0xc] sm:$0xf]
      %v1413 = vld [vmem:[%s1408 + $0x10] sm:$0xf]
      %v1414 = vld [vmem:[%s1408 + $0x14] sm:$0xf]
      %v1415 = vld [vmem:[%s1408 + $0x18] sm:$0xf]
      %v1416 = vld [vmem:[%s1408 + $0x1c] sm:$0xf]
      %v1417 = vld [vmem:[%s1408 + $0x20] sm:$0xf]
      %v1418 = vld [vmem:[%s1408 + $0x24] sm:$0xf]
      %v1419 = vld [vmem:[%s1408 + $0x28] sm:$0xf]
      %v1420 = vld [vmem:[%s1408 + $0x2c] sm:$0xf]
      %v1421 = vld [vmem:[%s1408 + $0x30] sm:$0xf]
      %v1422 = vld [vmem:[%s1408 + $0x34] sm:$0xf]
      %v1423 = vld [vmem:[%s1408 + $0x38] sm:$0xf]
      %v1424 = vld [vmem:[%s1408 + $0x3c] sm:$0xf]
      %s1425 = scalar_lea.vmem %s4, 2
      %v1426 = vld [vmem:[%s1425] sm:$0x1]
      %v1428 = vperm.slane %v1426, 0
      %v1446 = vunpack.c.l.b16 %v1409
      %v1447 = vunpack.c.l.b16 %v1410
      %v1448 = vunpack.c.l.b16 %v1411
      %v1449 = vunpack.c.l.b16 %v1412
      %v1450 = vunpack.c.l.b16 %v1413
      %v1451 = vunpack.c.l.b16 %v1414
      %v1452 = vunpack.c.l.b16 %v1415
      %v1453 = vunpack.c.l.b16 %v1416
      %v1454 = vunpack.c.l.b16 %v1417
      %v1455 = vunpack.c.l.b16 %v1418
      %v1456 = vunpack.c.l.b16 %v1419
      %v1457 = vunpack.c.l.b16 %v1420
      %v1458 = vunpack.c.l.b16 %v1421
      %v1459 = vunpack.c.l.b16 %v1422
      %v1460 = vunpack.c.l.b16 %v1423
      %v1461 = vunpack.c.l.b16 %v1424
      %v1462 = vpack.c.b16 %v1447, %v1446
      %v1463 = vpack.c.b16 %v1449, %v1448
      %v1464 = vpack.c.b16 %v1451, %v1450
      %v1465 = vpack.c.b16 %v1453, %v1452
      %v1466 = vpack.c.b16 %v1455, %v1454
      %v1467 = vpack.c.b16 %v1457, %v1456
      %v1468 = vpack.c.b16 %v1459, %v1458
      %v1469 = vpack.c.b16 %v1461, %v1460
      %1478 = vmatpush.bf16.msra.mxu0 %v1469
      %1479 = vmatpush.bf16.msra.mxu0 %v1468
      %1480 = vmatpush.bf16.msra.mxu0 %v1467
      %1481 = vmatpush.bf16.msra.mxu0 %v1466
      %1482 = vmatpush.bf16.msra.mxu0 %v1465
      %1483 = vmatpush.bf16.msra.mxu0 %v1464
      %1484 = vmatpush.bf16.msra.mxu0 %v1463
      %1485 = vmatpush.bf16.msra.mxu0 %v1462
      %1486 = vmatmul.bf16.gmra.mxu0 %v1327
      %v1487 = vpop.f32.mrf.mxu0
      %v1488 = vadd.f32 %v1428, %v1487
      %v1489 = vpop.f32.mrf.mxu0
      %v1490 = vadd.f32 %v1428, %v1489
      %1491 = vmatmul.bf16.gmra.mxu0 %v1328
      %v1492 = vpop.f32.mrf.mxu0
      %v1493 = vadd.f32 %v1428, %v1492
      %v1494 = vpop.f32.mrf.mxu0
      %v1495 = vadd.f32 %v1428, %v1494
      %1496 = vmatmul.bf16.gmra.mxu0 %v1329
      %v1497 = vpop.f32.mrf.mxu0
      %v1498 = vadd.f32 %v1428, %v1497
      %v1499 = vpop.f32.mrf.mxu0
      %v1500 = vadd.f32 %v1428, %v1499
      %1501 = vmatmul.bf16.gmra.mxu0 %v1330
      %v1502 = vpop.f32.mrf.mxu0
      %v1503 = vadd.f32 %v1428, %v1502
      %v1504 = vpop.f32.mrf.mxu0
      %v1505 = vadd.f32 %v1428, %v1504
      %1506 = vmatmul.bf16.gmra.mxu0 %v1331
      %v1507 = vpop.f32.mrf.mxu0
      %v1508 = vadd.f32 %v1428, %v1507
      %v1509 = vpop.f32.mrf.mxu0
      %v1510 = vadd.f32 %v1428, %v1509
      %1511 = vmatmul.bf16.gmra.mxu0 %v1332
      %v1512 = vpop.f32.mrf.mxu0
      %v1513 = vadd.f32 %v1428, %v1512
      %v1514 = vpop.f32.mrf.mxu0
      %v1515 = vadd.f32 %v1428, %v1514
      %1516 = vmatmul.bf16.gmra.mxu0 %v1333
      %v1517 = vpop.f32.mrf.mxu0
      %v1518 = vadd.f32 %v1428, %v1517
      %v1519 = vpop.f32.mrf.mxu0
      %v1520 = vadd.f32 %v1428, %v1519
      %1521 = vmatmul.bf16.gmra.mxu0 %v1334
      %v1522 = vpop.f32.mrf.mxu0
      %v1523 = vadd.f32 %v1428, %v1522
      %v1524 = vpop.f32.mrf.mxu0
      %v1525 = vadd.f32 %v1428, %v1524
      %1526 = vdwg.mxu0
      %v1527 = vtanh.pop %v1488
      %v1528 = vtanh.pop %v1490
      %v1529 = vtanh.pop %v1493
      %v1530 = vtanh.pop %v1495
      %v1531 = vtanh.pop %v1498
      %v1532 = vtanh.pop %v1500
      %v1533 = vtanh.pop %v1503
      %v1534 = vtanh.pop %v1505
      %v1535 = vtanh.pop %v1508
      %v1536 = vtanh.pop %v1510
      %v1537 = vtanh.pop %v1513
      %v1538 = vtanh.pop %v1515
      %v1539 = vtanh.pop %v1518
      %v1540 = vtanh.pop %v1520
      %v1541 = vtanh.pop %v1523
      %v1542 = vtanh.pop %v1525
      %v1543 = vpack.c.bf16 %v1528, %v1527
      %v1544 = vpack.c.bf16 %v1530, %v1529
      %v1545 = vpack.c.bf16 %v1532, %v1531
      %v1546 = vpack.c.bf16 %v1534, %v1533
      %v1547 = vpack.c.bf16 %v1536, %v1535
      %v1548 = vpack.c.bf16 %v1538, %v1537
      %v1549 = vpack.c.bf16 %v1540, %v1539
      %v1550 = vpack.c.bf16 %v1542, %v1541
      %1551 = vmatpush.bf16.msra.mxu0 %v1469
      %1552 = vmatpush.bf16.msra.mxu0 %v1468
      %1553 = vmatpush.bf16.msra.mxu0 %v1467
      %1554 = vmatpush.bf16.msra.mxu0 %v1466
      %1555 = vmatpush.bf16.msra.mxu0 %v1465
      %1556 = vmatpush.bf16.msra.mxu0 %v1464
      %1557 = vmatpush.bf16.msra.mxu0 %v1463
      %1558 = vmatpush.bf16.msra.mxu0 %v1462
      %1559 = vmatmul.bf16.gmra.mxu0 %v1400
      %v1560 = vpop.f32.mrf.mxu0
      %v1561 = vadd.f32 %v1428, %v1560
      %v1562 = vpop.f32.mrf.mxu0
      %v1563 = vadd.f32 %v1428, %v1562
      %1564 = vmatmul.bf16.gmra.mxu0 %v1401
      %v1565 = vpop.f32.mrf.mxu0
      %v1566 = vadd.f32 %v1428, %v1565
      %v1567 = vpop.f32.mrf.mxu0
      %v1568 = vadd.f32 %v1428, %v1567
      %1569 = vmatmul.bf16.gmra.mxu0 %v1402
      %v1570 = vpop.f32.mrf.mxu0
      %v1571 = vadd.f32 %v1428, %v1570
      %v1572 = vpop.f32.mrf.mxu0
      %v1573 = vadd.f32 %v1428, %v1572
      %1574 = vmatmul.bf16.gmra.mxu0 %v1403
      %v1575 = vpop.f32.mrf.mxu0
      %v1576 = vadd.f32 %v1428, %v1575
      %v1577 = vpop.f32.mrf.mxu0
      %v1578 = vadd.f32 %v1428, %v1577
      %1579 = vmatmul.bf16.gmra.mxu0 %v1404
      %v1580 = vpop.f32.mrf.mxu0
      %v1581 = vadd.f32 %v1428, %v1580
      %v1582 = vpop.f32.mrf.mxu0
      %v1583 = vadd.f32 %v1428, %v1582
      %1584 = vmatmul.bf16.gmra.mxu0 %v1405
      %v1585 = vpop.f32.mrf.mxu0
      %v1586 = vadd.f32 %v1428, %v1585
      %v1587 = vpop.f32.mrf.mxu0
      %v1588 = vadd.f32 %v1428, %v1587
      %1589 = vmatmul.bf16.gmra.mxu0 %v1406
      %v1590 = vpop.f32.mrf.mxu0
      %v1591 = vadd.f32 %v1428, %v1590
      %v1592 = vpop.f32.mrf.mxu0
      %v1593 = vadd.f32 %v1428, %v1592
      %1594 = vmatmul.bf16.gmra.mxu0 %v1407
      %v1595 = vpop.f32.mrf.mxu0
      %v1596 = vadd.f32 %v1428, %v1595
      %v1597 = vpop.f32.mrf.mxu0
      %v1598 = vadd.f32 %v1428, %v1597
      %1599 = vdwg.mxu0
      %v1600 = vtanh.pop %v1561
      %v1601 = vtanh.pop %v1563
      %v1602 = vtanh.pop %v1566
      %v1603 = vtanh.pop %v1568
      %v1604 = vtanh.pop %v1571
      %v1605 = vtanh.pop %v1573
      %v1606 = vtanh.pop %v1576
      %v1607 = vtanh.pop %v1578
      %v1608 = vtanh.pop %v1581
      %v1609 = vtanh.pop %v1583
      %v1610 = vtanh.pop %v1586
      %v1611 = vtanh.pop %v1588
      %v1612 = vtanh.pop %v1591
      %v1613 = vtanh.pop %v1593
      %v1614 = vtanh.pop %v1596
      %v1615 = vtanh.pop %v1598
      %v1616 = vpack.c.bf16 %v1601, %v1600
      %v1617 = vpack.c.bf16 %v1603, %v1602
      %v1618 = vpack.c.bf16 %v1605, %v1604
      %v1619 = vpack.c.bf16 %v1607, %v1606
      %v1620 = vpack.c.bf16 %v1609, %v1608
      %v1621 = vpack.c.bf16 %v1611, %v1610
      %v1622 = vpack.c.bf16 %v1613, %v1612
      %v1623 = vpack.c.bf16 %v1615, %v1614
      %s1624 = scalar_lea.vmem %s3, 192
      %v1625 = vld [vmem:[%s1624] sm:$0xf]
      %v1626 = vld [vmem:[%s1624 + $0x4] sm:$0xf]
      %v1627 = vld [vmem:[%s1624 + $0x8] sm:$0xf]
      %v1628 = vld [vmem:[%s1624 + $0xc] sm:$0xf]
      %v1629 = vld [vmem:[%s1624 + $0x10] sm:$0xf]
      %v1630 = vld [vmem:[%s1624 + $0x14] sm:$0xf]
      %v1631 = vld [vmem:[%s1624 + $0x18] sm:$0xf]
      %v1632 = vld [vmem:[%s1624 + $0x1c] sm:$0xf]
      %v1633 = vld [vmem:[%s1624 + $0x20] sm:$0xf]
      %v1634 = vld [vmem:[%s1624 + $0x24] sm:$0xf]
      %v1635 = vld [vmem:[%s1624 + $0x28] sm:$0xf]
      %v1636 = vld [vmem:[%s1624 + $0x2c] sm:$0xf]
      %v1637 = vld [vmem:[%s1624 + $0x30] sm:$0xf]
      %v1638 = vld [vmem:[%s1624 + $0x34] sm:$0xf]
      %v1639 = vld [vmem:[%s1624 + $0x38] sm:$0xf]
      %v1640 = vld [vmem:[%s1624 + $0x3c] sm:$0xf]
      %s1641 = scalar_lea.vmem %s4, 3
      %v1642 = vld [vmem:[%s1641] sm:$0x1]
      %v1644 = vperm.slane %v1642, 0
      %v1662 = vunpack.c.l.b16 %v1625
      %v1663 = vunpack.c.l.b16 %v1626
      %v1664 = vunpack.c.l.b16 %v1627
      %v1665 = vunpack.c.l.b16 %v1628
      %v1666 = vunpack.c.l.b16 %v1629
      %v1667 = vunpack.c.l.b16 %v1630
      %v1668 = vunpack.c.l.b16 %v1631
      %v1669 = vunpack.c.l.b16 %v1632
      %v1670 = vunpack.c.l.b16 %v1633
      %v1671 = vunpack.c.l.b16 %v1634
      %v1672 = vunpack.c.l.b16 %v1635
      %v1673 = vunpack.c.l.b16 %v1636
      %v1674 = vunpack.c.l.b16 %v1637
      %v1675 = vunpack.c.l.b16 %v1638
      %v1676 = vunpack.c.l.b16 %v1639
      %v1677 = vunpack.c.l.b16 %v1640
      %v1678 = vpack.c.b16 %v1663, %v1662
      %v1679 = vpack.c.b16 %v1665, %v1664
      %v1680 = vpack.c.b16 %v1667, %v1666
      %v1681 = vpack.c.b16 %v1669, %v1668
      %v1682 = vpack.c.b16 %v1671, %v1670
      %v1683 = vpack.c.b16 %v1673, %v1672
      %v1684 = vpack.c.b16 %v1675, %v1674
      %v1685 = vpack.c.b16 %v1677, %v1676
      %1694 = vmatpush.bf16.msra.mxu0 %v1685
      %1695 = vmatpush.bf16.msra.mxu0 %v1684
      %1696 = vmatpush.bf16.msra.mxu0 %v1683
      %1697 = vmatpush.bf16.msra.mxu0 %v1682
      %1698 = vmatpush.bf16.msra.mxu0 %v1681
      %1699 = vmatpush.bf16.msra.mxu0 %v1680
      %1700 = vmatpush.bf16.msra.mxu0 %v1679
      %1701 = vmatpush.bf16.msra.mxu0 %v1678
      %1702 = vmatmul.bf16.gmra.mxu0 %v1543
      %v1703 = vpop.f32.mrf.mxu0
      %v1704 = vadd.f32 %v1644, %v1703
      %v1705 = vpop.f32.mrf.mxu0
      %v1706 = vadd.f32 %v1644, %v1705
      %1707 = vmatmul.bf16.gmra.mxu0 %v1544
      %v1708 = vpop.f32.mrf.mxu0
      %v1709 = vadd.f32 %v1644, %v1708
      %v1710 = vpop.f32.mrf.mxu0
      %v1711 = vadd.f32 %v1644, %v1710
      %1712 = vmatmul.bf16.gmra.mxu0 %v1545
      %v1713 = vpop.f32.mrf.mxu0
      %v1714 = vadd.f32 %v1644, %v1713
      %v1715 = vpop.f32.mrf.mxu0
      %v1716 = vadd.f32 %v1644, %v1715
      %1717 = vmatmul.bf16.gmra.mxu0 %v1546
      %v1718 = vpop.f32.mrf.mxu0
      %v1719 = vadd.f32 %v1644, %v1718
      %v1720 = vpop.f32.mrf.mxu0
      %v1721 = vadd.f32 %v1644, %v1720
      %1722 = vmatmul.bf16.gmra.mxu0 %v1547
      %v1723 = vpop.f32.mrf.mxu0
      %v1724 = vadd.f32 %v1644, %v1723
      %v1725 = vpop.f32.mrf.mxu0
      %v1726 = vadd.f32 %v1644, %v1725
      %1727 = vmatmul.bf16.gmra.mxu0 %v1548
      %v1728 = vpop.f32.mrf.mxu0
      %v1729 = vadd.f32 %v1644, %v1728
      %v1730 = vpop.f32.mrf.mxu0
      %v1731 = vadd.f32 %v1644, %v1730
      %1732 = vmatmul.bf16.gmra.mxu0 %v1549
      %v1733 = vpop.f32.mrf.mxu0
      %v1734 = vadd.f32 %v1644, %v1733
      %v1735 = vpop.f32.mrf.mxu0
      %v1736 = vadd.f32 %v1644, %v1735
      %1737 = vmatmul.bf16.gmra.mxu0 %v1550
      %v1738 = vpop.f32.mrf.mxu0
      %v1739 = vadd.f32 %v1644, %v1738
      %v1740 = vpop.f32.mrf.mxu0
      %v1741 = vadd.f32 %v1644, %v1740
      %1742 = vdwg.mxu0
      %v1743 = vtanh.pop %v1704
      %v1744 = vtanh.pop %v1706
      %v1745 = vtanh.pop %v1709
      %v1746 = vtanh.pop %v1711
      %v1747 = vtanh.pop %v1714
      %v1748 = vtanh.pop %v1716
      %v1749 = vtanh.pop %v1719
      %v1750 = vtanh.pop %v1721
      %v1751 = vtanh.pop %v1724
      %v1752 = vtanh.pop %v1726
      %v1753 = vtanh.pop %v1729
      %v1754 = vtanh.pop %v1731
      %v1755 = vtanh.pop %v1734
      %v1756 = vtanh.pop %v1736
      %v1757 = vtanh.pop %v1739
      %v1758 = vtanh.pop %v1741
      %v1759 = vpack.c.bf16 %v1744, %v1743
      %v1760 = vpack.c.bf16 %v1746, %v1745
      %v1761 = vpack.c.bf16 %v1748, %v1747
      %v1762 = vpack.c.bf16 %v1750, %v1749
      %v1763 = vpack.c.bf16 %v1752, %v1751
      %v1764 = vpack.c.bf16 %v1754, %v1753
      %v1765 = vpack.c.bf16 %v1756, %v1755
      %v1766 = vpack.c.bf16 %v1758, %v1757
      %1767 = vmatpush.bf16.msra.mxu0 %v1685
      %1768 = vmatpush.bf16.msra.mxu0 %v1684
      %1769 = vmatpush.bf16.msra.mxu0 %v1683
      %1770 = vmatpush.bf16.msra.mxu0 %v1682
      %1771 = vmatpush.bf16.msra.mxu0 %v1681
      %1772 = vmatpush.bf16.msra.mxu0 %v1680
      %1773 = vmatpush.bf16.msra.mxu0 %v1679
      %1774 = vmatpush.bf16.msra.mxu0 %v1678
      %1775 = vmatmul.bf16.gmra.mxu0 %v1616
      %v1776 = vpop.f32.mrf.mxu0
      %v1777 = vadd.f32 %v1644, %v1776
      %v1778 = vpop.f32.mrf.mxu0
      %v1779 = vadd.f32 %v1644, %v1778
      %1780 = vmatmul.bf16.gmra.mxu0 %v1617
      %v1781 = vpop.f32.mrf.mxu0
      %v1782 = vadd.f32 %v1644, %v1781
      %v1783 = vpop.f32.mrf.mxu0
      %v1784 = vadd.f32 %v1644, %v1783
      %1785 = vmatmul.bf16.gmra.mxu0 %v1618
      %v1786 = vpop.f32.mrf.mxu0
      %v1787 = vadd.f32 %v1644, %v1786
      %v1788 = vpop.f32.mrf.mxu0
      %v1789 = vadd.f32 %v1644, %v1788
      %1790 = vmatmul.bf16.gmra.mxu0 %v1619
      %v1791 = vpop.f32.mrf.mxu0
      %v1792 = vadd.f32 %v1644, %v1791
      %v1793 = vpop.f32.mrf.mxu0
      %v1794 = vadd.f32 %v1644, %v1793
      %1795 = vmatmul.bf16.gmra.mxu0 %v1620
      %v1796 = vpop.f32.mrf.mxu0
      %v1797 = vadd.f32 %v1644, %v1796
      %v1798 = vpop.f32.mrf.mxu0
      %v1799 = vadd.f32 %v1644, %v1798
      %1800 = vmatmul.bf16.gmra.mxu0 %v1621
      %v1801 = vpop.f32.mrf.mxu0
      %v1802 = vadd.f32 %v1644, %v1801
      %v1803 = vpop.f32.mrf.mxu0
      %v1804 = vadd.f32 %v1644, %v1803
      %1805 = vmatmul.bf16.gmra.mxu0 %v1622
      %v1806 = vpop.f32.mrf.mxu0
      %v1807 = vadd.f32 %v1644, %v1806
      %v1808 = vpop.f32.mrf.mxu0
      %v1809 = vadd.f32 %v1644, %v1808
      %1810 = vmatmul.bf16.gmra.mxu0 %v1623
      %v1811 = vpop.f32.mrf.mxu0
      %v1812 = vadd.f32 %v1644, %v1811
      %v1813 = vpop.f32.mrf.mxu0
      %v1814 = vadd.f32 %v1644, %v1813
      %1815 = vdwg.mxu0
      %v1816 = vtanh.pop %v1777
      %v1817 = vtanh.pop %v1779
      %v1818 = vtanh.pop %v1782
      %v1819 = vtanh.pop %v1784
      %v1820 = vtanh.pop %v1787
      %v1821 = vtanh.pop %v1789
      %v1822 = vtanh.pop %v1792
      %v1823 = vtanh.pop %v1794
      %v1824 = vtanh.pop %v1797
      %v1825 = vtanh.pop %v1799
      %v1826 = vtanh.pop %v1802
      %v1827 = vtanh.pop %v1804
      %v1828 = vtanh.pop %v1807
      %v1829 = vtanh.pop %v1809
      %v1830 = vtanh.pop %v1812
      %v1831 = vtanh.pop %v1814
      %v1832 = vpack.c.bf16 %v1817, %v1816
      %v1833 = vpack.c.bf16 %v1819, %v1818
      %v1834 = vpack.c.bf16 %v1821, %v1820
      %v1835 = vpack.c.bf16 %v1823, %v1822
      %v1836 = vpack.c.bf16 %v1825, %v1824
      %v1837 = vpack.c.bf16 %v1827, %v1826
      %v1838 = vpack.c.bf16 %v1829, %v1828
      %v1839 = vpack.c.bf16 %v1831, %v1830
      %v1840 = vld [vmem:[%s5] sm:$0xf]
      %v1841 = vld [vmem:[%s5 + $0x4] sm:$0xf]
      %v1842 = vld [vmem:[%s5 + $0x8] sm:$0xf]
      %v1843 = vld [vmem:[%s5 + $0xc] sm:$0xf]
      %v1844 = vld [vmem:[%s5 + $0x10] sm:$0xf]
      %v1845 = vld [vmem:[%s5 + $0x14] sm:$0xf]
      %v1846 = vld [vmem:[%s5 + $0x18] sm:$0xf]
      %v1847 = vld [vmem:[%s5 + $0x1c] sm:$0xf]
      %v1848 = vld [vmem:[%s5 + $0x20] sm:$0xf]
      %v1849 = vld [vmem:[%s5 + $0x24] sm:$0xf]
      %v1850 = vld [vmem:[%s5 + $0x28] sm:$0xf]
      %v1851 = vld [vmem:[%s5 + $0x2c] sm:$0xf]
      %v1852 = vld [vmem:[%s5 + $0x30] sm:$0xf]
      %v1853 = vld [vmem:[%s5 + $0x34] sm:$0xf]
      %v1854 = vld [vmem:[%s5 + $0x38] sm:$0xf]
      %v1855 = vld [vmem:[%s5 + $0x3c] sm:$0xf]
      %v1856 = vld [vmem:[%s6] sm:$0x1]
      %v1858 = vperm.slane %v1856, 0
      %v1876 = vunpack.c.l.b16 %v1840
      %v1877 = vunpack.c.l.b16 %v1841
      %v1878 = vunpack.c.l.b16 %v1842
      %v1879 = vunpack.c.l.b16 %v1843
      %v1880 = vunpack.c.l.b16 %v1844
      %v1881 = vunpack.c.l.b16 %v1845
      %v1882 = vunpack.c.l.b16 %v1846
      %v1883 = vunpack.c.l.b16 %v1847
      %v1884 = vunpack.c.l.b16 %v1848
      %v1885 = vunpack.c.l.b16 %v1849
      %v1886 = vunpack.c.l.b16 %v1850
      %v1887 = vunpack.c.l.b16 %v1851
      %v1888 = vunpack.c.l.b16 %v1852
      %v1889 = vunpack.c.l.b16 %v1853
      %v1890 = vunpack.c.l.b16 %v1854
      %v1891 = vunpack.c.l.b16 %v1855
      %v1892 = vpack.c.b16 %v1877, %v1876
      %v1893 = vpack.c.b16 %v1879, %v1878
      %v1894 = vpack.c.b16 %v1881, %v1880
      %v1895 = vpack.c.b16 %v1883, %v1882
      %v1896 = vpack.c.b16 %v1885, %v1884
      %v1897 = vpack.c.b16 %v1887, %v1886
      %v1898 = vpack.c.b16 %v1889, %v1888
      %v1899 = vpack.c.b16 %v1891, %v1890
      %1908 = vmatpush.bf16.msra.mxu0 %v1899
      %1909 = vmatpush.bf16.msra.mxu0 %v1898
      %1910 = vmatpush.bf16.msra.mxu0 %v1897
      %1911 = vmatpush.bf16.msra.mxu0 %v1896
      %1912 = vmatpush.bf16.msra.mxu0 %v1895
      %1913 = vmatpush.bf16.msra.mxu0 %v1894
      %1914 = vmatpush.bf16.msra.mxu0 %v1893
      %1915 = vmatpush.bf16.msra.mxu0 %v1892
      %1916 = vmatmul.bf16.gmra.mxu0 %v1759
      %v1917 = vpop.f32.mrf.mxu0
      %v1918 = vadd.f32 %v1858, %v1917
      %v1919 = vpop.f32.mrf.mxu0
      %v1920 = vadd.f32 %v1858, %v1919
      %1921 = vmatmul.bf16.gmra.mxu0 %v1760
      %v1922 = vpop.f32.mrf.mxu0
      %v1923 = vadd.f32 %v1858, %v1922
      %v1924 = vpop.f32.mrf.mxu0
      %v1925 = vadd.f32 %v1858, %v1924
      %1926 = vmatmul.bf16.gmra.mxu0 %v1761
      %v1927 = vpop.f32.mrf.mxu0
      %v1928 = vadd.f32 %v1858, %v1927
      %v1929 = vpop.f32.mrf.mxu0
      %v1930 = vadd.f32 %v1858, %v1929
      %1931 = vmatmul.bf16.gmra.mxu0 %v1762
      %v1932 = vpop.f32.mrf.mxu0
      %v1933 = vadd.f32 %v1858, %v1932
      %v1934 = vpop.f32.mrf.mxu0
      %v1935 = vadd.f32 %v1858, %v1934
      %1936 = vmatmul.bf16.gmra.mxu0 %v1763
      %v1937 = vpop.f32.mrf.mxu0
      %v1938 = vadd.f32 %v1858, %v1937
      %v1939 = vpop.f32.mrf.mxu0
      %v1940 = vadd.f32 %v1858, %v1939
      %1941 = vmatmul.bf16.gmra.mxu0 %v1764
      %v1942 = vpop.f32.mrf.mxu0
      %v1943 = vadd.f32 %v1858, %v1942
      %v1944 = vpop.f32.mrf.mxu0
      %v1945 = vadd.f32 %v1858, %v1944
      %1946 = vmatmul.bf16.gmra.mxu0 %v1765
      %v1947 = vpop.f32.mrf.mxu0
      %v1948 = vadd.f32 %v1858, %v1947
      %v1949 = vpop.f32.mrf.mxu0
      %v1950 = vadd.f32 %v1858, %v1949
      %1951 = vmatmul.bf16.gmra.mxu0 %v1766
      %v1952 = vpop.f32.mrf.mxu0
      %v1953 = vadd.f32 %v1858, %v1952
      %v1954 = vpop.f32.mrf.mxu0
      %v1955 = vadd.f32 %v1858, %v1954
      %1956 = vdwg.mxu0
      %1957 = vmatpush.bf16.msra.mxu0 %v1899
      %1958 = vmatpush.bf16.msra.mxu0 %v1898
      %1959 = vmatpush.bf16.msra.mxu0 %v1897
      %1960 = vmatpush.bf16.msra.mxu0 %v1896
      %1961 = vmatpush.bf16.msra.mxu0 %v1895
      %1962 = vmatpush.bf16.msra.mxu0 %v1894
      %1963 = vmatpush.bf16.msra.mxu0 %v1893
      %1964 = vmatpush.bf16.msra.mxu0 %v1892
      %1965 = vmatmul.bf16.gmra.mxu0 %v1832
      %v1966 = vpop.f32.mrf.mxu0
      %v1967 = vadd.f32 %v1858, %v1966
      %v1968 = vpop.f32.mrf.mxu0
      %v1969 = vadd.f32 %v1858, %v1968
      %1970 = vmatmul.bf16.gmra.mxu0 %v1833
      %v1971 = vpop.f32.mrf.mxu0
      %v1972 = vadd.f32 %v1858, %v1971
      %v1973 = vpop.f32.mrf.mxu0
      %v1974 = vadd.f32 %v1858, %v1973
      %1975 = vmatmul.bf16.gmra.mxu0 %v1834
      %v1976 = vpop.f32.mrf.mxu0
      %v1977 = vadd.f32 %v1858, %v1976
      %v1978 = vpop.f32.mrf.mxu0
      %v1979 = vadd.f32 %v1858, %v1978
      %1980 = vmatmul.bf16.gmra.mxu0 %v1835
      %v1981 = vpop.f32.mrf.mxu0
      %v1982 = vadd.f32 %v1858, %v1981
      %v1983 = vpop.f32.mrf.mxu0
      %v1984 = vadd.f32 %v1858, %v1983
      %1985 = vmatmul.bf16.gmra.mxu0 %v1836
      %v1986 = vpop.f32.mrf.mxu0
      %v1987 = vadd.f32 %v1858, %v1986
      %v1988 = vpop.f32.mrf.mxu0
      %v1989 = vadd.f32 %v1858, %v1988
      %1990 = vmatmul.bf16.gmra.mxu0 %v1837
      %v1991 = vpop.f32.mrf.mxu0
      %v1992 = vadd.f32 %v1858, %v1991
      %v1993 = vpop.f32.mrf.mxu0
      %v1994 = vadd.f32 %v1858, %v1993
      %1995 = vmatmul.bf16.gmra.mxu0 %v1838
      %v1996 = vpop.f32.mrf.mxu0
      %v1997 = vadd.f32 %v1858, %v1996
      %v1998 = vpop.f32.mrf.mxu0
      %v1999 = vadd.f32 %v1858, %v1998
      %2000 = vmatmul.bf16.gmra.mxu0 %v1839
      %v2001 = vpop.f32.mrf.mxu0
      %v2002 = vadd.f32 %v1858, %v2001
      %v2003 = vpop.f32.mrf.mxu0
      %v2004 = vadd.f32 %v1858, %v2003
      %2005 = vdwg.mxu0
      %v2006 = vmul.f32 %v282, %v282
      %v2007 = vmul.f32 %v283, %v283
      %v2008 = vmul.f32 %v284, %v284
      %v2009 = vmul.f32 %v285, %v285
      %v2010 = vmul.f32 %v286, %v286
      %v2011 = vmul.f32 %v287, %v287
      %v2012 = vmul.f32 %v288, %v288
      %v2013 = vmul.f32 %v289, %v289
      %v2014 = vmul.f32 %v290, %v290
      %v2015 = vmul.f32 %v291, %v291
      %v2016 = vmul.f32 %v292, %v292
      %v2017 = vmul.f32 %v293, %v293
      %v2018 = vmul.f32 %v294, %v294
      %v2019 = vmul.f32 %v295, %v295
      %v2020 = vmul.f32 %v296, %v296
      %v2021 = vmul.f32 %v297, %v297
      %v2022 = vmul.f32 %v298, %v298
      %v2023 = vmul.f32 %v299, %v299
      %v2024 = vmul.f32 %v300, %v300
      %v2025 = vmul.f32 %v301, %v301
      %v2026 = vmul.f32 %v302, %v302
      %v2027 = vmul.f32 %v303, %v303
      %v2028 = vmul.f32 %v304, %v304
      %v2029 = vmul.f32 %v305, %v305
      %v2030 = vmul.f32 %v306, %v306
      %v2031 = vmul.f32 %v307, %v307
      %v2032 = vmul.f32 %v308, %v308
      %v2033 = vmul.f32 %v309, %v309
      %v2034 = vmul.f32 %v310, %v310
      %v2035 = vmul.f32 %v311, %v311
      %v2036 = vmul.f32 %v312, %v312
      %v2037 = vmul.f32 %v313, %v313
      %v2038 = vsub.f32 1.0, %v2006
      %v2039 = vsub.f32 1.0, %v2007
      %v2040 = vsub.f32 1.0, %v2008
      %v2041 = vsub.f32 1.0, %v2009
      %v2042 = vsub.f32 1.0, %v2010
      %v2043 = vsub.f32 1.0, %v2011
      %v2044 = vsub.f32 1.0, %v2012
      %v2045 = vsub.f32 1.0, %v2013
      %v2046 = vsub.f32 1.0, %v2014
      %v2047 = vsub.f32 1.0, %v2015
      %v2048 = vsub.f32 1.0, %v2016
      %v2049 = vsub.f32 1.0, %v2017
      %v2050 = vsub.f32 1.0, %v2018
      %v2051 = vsub.f32 1.0, %v2019
      %v2052 = vsub.f32 1.0, %v2020
      %v2053 = vsub.f32 1.0, %v2021
      %v2054 = vsub.f32 1.0, %v2022
      %v2055 = vsub.f32 1.0, %v2023
      %v2056 = vsub.f32 1.0, %v2024
      %v2057 = vsub.f32 1.0, %v2025
      %v2058 = vsub.f32 1.0, %v2026
      %v2059 = vsub.f32 1.0, %v2027
      %v2060 = vsub.f32 1.0, %v2028
      %v2061 = vsub.f32 1.0, %v2029
      %v2062 = vsub.f32 1.0, %v2030
      %v2063 = vsub.f32 1.0, %v2031
      %v2064 = vsub.f32 1.0, %v2032
      %v2065 = vsub.f32 1.0, %v2033
      %v2066 = vsub.f32 1.0, %v2034
      %v2067 = vsub.f32 1.0, %v2035
      %v2068 = vsub.f32 1.0, %v2036
      %v2069 = vsub.f32 1.0, %v2037
      %2102 = vrot.lane.b32.xlu0 %v2038, 127
      %v2103 = vpop.permute.xlu0 %2102
      %2104 = vrot.lane.b32.xlu0 %v2039, 127
      %v2105 = vpop.permute.xlu0 %2104
      %2106 = vrot.lane.b32.xlu0 %v2040, 127
      %v2107 = vpop.permute.xlu0 %2106
      %2108 = vrot.lane.b32.xlu0 %v2041, 127
      %v2109 = vpop.permute.xlu0 %2108
      %2110 = vrot.lane.b32.xlu0 %v2042, 127
      %v2111 = vpop.permute.xlu0 %2110
      %2112 = vrot.lane.b32.xlu0 %v2043, 127
      %v2113 = vpop.permute.xlu0 %2112
      %2114 = vrot.lane.b32.xlu0 %v2044, 127
      %v2115 = vpop.permute.xlu0 %2114
      %2116 = vrot.lane.b32.xlu0 %v2045, 127
      %v2117 = vpop.permute.xlu0 %2116
      %2118 = vrot.lane.b32.xlu0 %v2046, 127
      %v2119 = vpop.permute.xlu0 %2118
      %2120 = vrot.lane.b32.xlu0 %v2047, 127
      %v2121 = vpop.permute.xlu0 %2120
      %2122 = vrot.lane.b32.xlu0 %v2048, 127
      %v2123 = vpop.permute.xlu0 %2122
      %2124 = vrot.lane.b32.xlu0 %v2049, 127
      %v2125 = vpop.permute.xlu0 %2124
      %2126 = vrot.lane.b32.xlu0 %v2050, 127
      %v2127 = vpop.permute.xlu0 %2126
      %2128 = vrot.lane.b32.xlu0 %v2051, 127
      %v2129 = vpop.permute.xlu0 %2128
      %2130 = vrot.lane.b32.xlu0 %v2052, 127
      %v2131 = vpop.permute.xlu0 %2130
      %2132 = vrot.lane.b32.xlu0 %v2053, 127
      %v2133 = vpop.permute.xlu0 %2132
      %2134 = vrot.lane.b32.xlu0 %v2054, 127
      %v2135 = vpop.permute.xlu0 %2134
      %2136 = vrot.lane.b32.xlu0 %v2055, 127
      %v2137 = vpop.permute.xlu0 %2136
      %2138 = vrot.lane.b32.xlu0 %v2056, 127
      %v2139 = vpop.permute.xlu0 %2138
      %2140 = vrot.lane.b32.xlu0 %v2057, 127
      %v2141 = vpop.permute.xlu0 %2140
      %2142 = vrot.lane.b32.xlu0 %v2058, 127
      %v2143 = vpop.permute.xlu0 %2142
      %2144 = vrot.lane.b32.xlu0 %v2059, 127
      %v2145 = vpop.permute.xlu0 %2144
      %2146 = vrot.lane.b32.xlu0 %v2060, 127
      %v2147 = vpop.permute.xlu0 %2146
      %2148 = vrot.lane.b32.xlu0 %v2061, 127
      %v2149 = vpop.permute.xlu0 %2148
      %2150 = vrot.lane.b32.xlu0 %v2062, 127
      %v2151 = vpop.permute.xlu0 %2150
      %2152 = vrot.lane.b32.xlu0 %v2063, 127
      %v2153 = vpop.permute.xlu0 %2152
      %2154 = vrot.lane.b32.xlu0 %v2064, 127
      %v2155 = vpop.permute.xlu0 %2154
      %2156 = vrot.lane.b32.xlu0 %v2065, 127
      %v2157 = vpop.permute.xlu0 %2156
      %2158 = vrot.lane.b32.xlu0 %v2066, 127
      %v2159 = vpop.permute.xlu0 %2158
      %2160 = vrot.lane.b32.xlu0 %v2067, 127
      %v2161 = vpop.permute.xlu0 %2160
      %2162 = vrot.lane.b32.xlu0 %v2068, 127
      %v2163 = vpop.permute.xlu0 %2162
      %2164 = vrot.lane.b32.xlu0 %v2069, 127
      %v2165 = vpop.permute.xlu0 %2164
      %v2198 = vmul.f32 %v2038, %v2103
      %v2199 = vmul.f32 %v2039, %v2105
      %v2200 = vmul.f32 %v2040, %v2107
      %v2201 = vmul.f32 %v2041, %v2109
      %v2202 = vmul.f32 %v2042, %v2111
      %v2203 = vmul.f32 %v2043, %v2113
      %v2204 = vmul.f32 %v2044, %v2115
      %v2205 = vmul.f32 %v2045, %v2117
      %v2206 = vmul.f32 %v2046, %v2119
      %v2207 = vmul.f32 %v2047, %v2121
      %v2208 = vmul.f32 %v2048, %v2123
      %v2209 = vmul.f32 %v2049, %v2125
      %v2210 = vmul.f32 %v2050, %v2127
      %v2211 = vmul.f32 %v2051, %v2129
      %v2212 = vmul.f32 %v2052, %v2131
      %v2213 = vmul.f32 %v2053, %v2133
      %v2214 = vmul.f32 %v2054, %v2135
      %v2215 = vmul.f32 %v2055, %v2137
      %v2216 = vmul.f32 %v2056, %v2139
      %v2217 = vmul.f32 %v2057, %v2141
      %v2218 = vmul.f32 %v2058, %v2143
      %v2219 = vmul.f32 %v2059, %v2145
      %v2220 = vmul.f32 %v2060, %v2147
      %v2221 = vmul.f32 %v2061, %v2149
      %v2222 = vmul.f32 %v2062, %v2151
      %v2223 = vmul.f32 %v2063, %v2153
      %v2224 = vmul.f32 %v2064, %v2155
      %v2225 = vmul.f32 %v2065, %v2157
      %v2226 = vmul.f32 %v2066, %v2159
      %v2227 = vmul.f32 %v2067, %v2161
      %v2228 = vmul.f32 %v2068, %v2163
      %v2229 = vmul.f32 %v2069, %v2165
      %2230 = vrot.lane.b32.xlu0 %v2038, 126
      %v2231 = vpop.permute.xlu0 %2230
      %2232 = vrot.lane.b32.xlu0 %v2039, 126
      %v2233 = vpop.permute.xlu0 %2232
      %2234 = vrot.lane.b32.xlu0 %v2040, 126
      %v2235 = vpop.permute.xlu0 %2234
      %2236 = vrot.lane.b32.xlu0 %v2041, 126
      %v2237 = vpop.permute.xlu0 %2236
      %2238 = vrot.lane.b32.xlu0 %v2042, 126
      %v2239 = vpop.permute.xlu0 %2238
      %2240 = vrot.lane.b32.xlu0 %v2043, 126
      %v2241 = vpop.permute.xlu0 %2240
      %2242 = vrot.lane.b32.xlu0 %v2044, 126
      %v2243 = vpop.permute.xlu0 %2242
      %2244 = vrot.lane.b32.xlu0 %v2045, 126
      %v2245 = vpop.permute.xlu0 %2244
      %2246 = vrot.lane.b32.xlu0 %v2046, 126
      %v2247 = vpop.permute.xlu0 %2246
      %2248 = vrot.lane.b32.xlu0 %v2047, 126
      %v2249 = vpop.permute.xlu0 %2248
      %2250 = vrot.lane.b32.xlu0 %v2048, 126
      %v2251 = vpop.permute.xlu0 %2250
      %2252 = vrot.lane.b32.xlu0 %v2049, 126
      %v2253 = vpop.permute.xlu0 %2252
      %2254 = vrot.lane.b32.xlu0 %v2050, 126
      %v2255 = vpop.permute.xlu0 %2254
      %2256 = vrot.lane.b32.xlu0 %v2051, 126
      %v2257 = vpop.permute.xlu0 %2256
      %2258 = vrot.lane.b32.xlu0 %v2052, 126
      %v2259 = vpop.permute.xlu0 %2258
      %2260 = vrot.lane.b32.xlu0 %v2053, 126
      %v2261 = vpop.permute.xlu0 %2260
      %2262 = vrot.lane.b32.xlu0 %v2054, 126
      %v2263 = vpop.permute.xlu0 %2262
      %2264 = vrot.lane.b32.xlu0 %v2055, 126
      %v2265 = vpop.permute.xlu0 %2264
      %2266 = vrot.lane.b32.xlu0 %v2056, 126
      %v2267 = vpop.permute.xlu0 %2266
      %2268 = vrot.lane.b32.xlu0 %v2057, 126
      %v2269 = vpop.permute.xlu0 %2268
      %2270 = vrot.lane.b32.xlu0 %v2058, 126
      %v2271 = vpop.permute.xlu0 %2270
      %2272 = vrot.lane.b32.xlu0 %v2059, 126
      %v2273 = vpop.permute.xlu0 %2272
      %2274 = vrot.lane.b32.xlu0 %v2060, 126
      %v2275 = vpop.permute.xlu0 %2274
      %2276 = vrot.lane.b32.xlu0 %v2061, 126
      %v2277 = vpop.permute.xlu0 %2276
      %2278 = vrot.lane.b32.xlu0 %v2062, 126
      %v2279 = vpop.permute.xlu0 %2278
      %2280 = vrot.lane.b32.xlu0 %v2063, 126
      %v2281 = vpop.permute.xlu0 %2280
      %2282 = vrot.lane.b32.xlu0 %v2064, 126
      %v2283 = vpop.permute.xlu0 %2282
      %2284 = vrot.lane.b32.xlu0 %v2065, 126
      %v2285 = vpop.permute.xlu0 %2284
      %2286 = vrot.lane.b32.xlu0 %v2066, 126
      %v2287 = vpop.permute.xlu0 %2286
      %2288 = vrot.lane.b32.xlu0 %v2067, 126
      %v2289 = vpop.permute.xlu0 %2288
      %2290 = vrot.lane.b32.xlu0 %v2068, 126
      %v2291 = vpop.permute.xlu0 %2290
      %2292 = vrot.lane.b32.xlu0 %v2069, 126
      %v2293 = vpop.permute.xlu0 %2292
      %v2326 = vmul.f32 %v2198, %v2231
      %v2327 = vmul.f32 %v2199, %v2233
      %v2328 = vmul.f32 %v2200, %v2235
      %v2329 = vmul.f32 %v2201, %v2237
      %v2330 = vmul.f32 %v2202, %v2239
      %v2331 = vmul.f32 %v2203, %v2241
      %v2332 = vmul.f32 %v2204, %v2243
      %v2333 = vmul.f32 %v2205, %v2245
      %v2334 = vmul.f32 %v2206, %v2247
      %v2335 = vmul.f32 %v2207, %v2249
      %v2336 = vmul.f32 %v2208, %v2251
      %v2337 = vmul.f32 %v2209, %v2253
      %v2338 = vmul.f32 %v2210, %v2255
      %v2339 = vmul.f32 %v2211, %v2257
      %v2340 = vmul.f32 %v2212, %v2259
      %v2341 = vmul.f32 %v2213, %v2261
      %v2342 = vmul.f32 %v2214, %v2263
      %v2343 = vmul.f32 %v2215, %v2265
      %v2344 = vmul.f32 %v2216, %v2267
      %v2345 = vmul.f32 %v2217, %v2269
      %v2346 = vmul.f32 %v2218, %v2271
      %v2347 = vmul.f32 %v2219, %v2273
      %v2348 = vmul.f32 %v2220, %v2275
      %v2349 = vmul.f32 %v2221, %v2277
      %v2350 = vmul.f32 %v2222, %v2279
      %v2351 = vmul.f32 %v2223, %v2281
      %v2352 = vmul.f32 %v2224, %v2283
      %v2353 = vmul.f32 %v2225, %v2285
      %v2354 = vmul.f32 %v2226, %v2287
      %v2355 = vmul.f32 %v2227, %v2289
      %v2356 = vmul.f32 %v2228, %v2291
      %v2357 = vmul.f32 %v2229, %v2293
      %v2358 = vlaneseq
      %v2359 = vand.u32 %v2358, 127
      %vm2360 = vcmp.eq.s32.totalorder %v2359, 0
      %2362 = vset.pattern.permute.xlu0 0
      %2363 = vperm.xlu0 %2362, %v2326
      %v2364 = vpop.permute.xlu0 %2363
      %2367 = vset.pattern.permute.xlu0 0
      %2368 = vperm.xlu0 %2367, %v2327
      %v2369 = vpop.permute.xlu0 %2368
      %2372 = vset.pattern.permute.xlu0 0
      %2373 = vperm.xlu0 %2372, %v2328
      %v2374 = vpop.permute.xlu0 %2373
      %2377 = vset.pattern.permute.xlu0 0
      %2378 = vperm.xlu0 %2377, %v2329
      %v2379 = vpop.permute.xlu0 %2378
      %2382 = vset.pattern.permute.xlu0 0
      %2383 = vperm.xlu0 %2382, %v2330
      %v2384 = vpop.permute.xlu0 %2383
      %2387 = vset.pattern.permute.xlu0 0
      %2388 = vperm.xlu0 %2387, %v2331
      %v2389 = vpop.permute.xlu0 %2388
      %2392 = vset.pattern.permute.xlu0 0
      %2393 = vperm.xlu0 %2392, %v2332
      %v2394 = vpop.permute.xlu0 %2393
      %2397 = vset.pattern.permute.xlu0 0
      %2398 = vperm.xlu0 %2397, %v2333
      %v2399 = vpop.permute.xlu0 %2398
      %2402 = vset.pattern.permute.xlu0 0
      %2403 = vperm.xlu0 %2402, %v2334
      %v2404 = vpop.permute.xlu0 %2403
      %2407 = vset.pattern.permute.xlu0 0
      %2408 = vperm.xlu0 %2407, %v2335
      %v2409 = vpop.permute.xlu0 %2408
      %2412 = vset.pattern.permute.xlu0 0
      %2413 = vperm.xlu0 %2412, %v2336
      %v2414 = vpop.permute.xlu0 %2413
      %2417 = vset.pattern.permute.xlu0 0
      %2418 = vperm.xlu0 %2417, %v2337
      %v2419 = vpop.permute.xlu0 %2418
      %2422 = vset.pattern.permute.xlu0 0
      %2423 = vperm.xlu0 %2422, %v2338
      %v2424 = vpop.permute.xlu0 %2423
      %2427 = vset.pattern.permute.xlu0 0
      %2428 = vperm.xlu0 %2427, %v2339
      %v2429 = vpop.permute.xlu0 %2428
      %2432 = vset.pattern.permute.xlu0 0
      %2433 = vperm.xlu0 %2432, %v2340
      %v2434 = vpop.permute.xlu0 %2433
      %2437 = vset.pattern.permute.xlu0 0
      %2438 = vperm.xlu0 %2437, %v2341
      %v2439 = vpop.permute.xlu0 %2438
      %v2441 = vsel %vm2360, 1.0, %v2364
      %v2442 = vsel %vm2360, 1.0, %v2369
      %v2443 = vsel %vm2360, 1.0, %v2374
      %v2444 = vsel %vm2360, 1.0, %v2379
      %v2445 = vsel %vm2360, 1.0, %v2384
      %v2446 = vsel %vm2360, 1.0, %v2389
      %v2447 = vsel %vm2360, 1.0, %v2394
      %v2448 = vsel %vm2360, 1.0, %v2399
      %v2449 = vsel %vm2360, 1.0, %v2404
      %v2450 = vsel %vm2360, 1.0, %v2409
      %v2451 = vsel %vm2360, 1.0, %v2414
      %v2452 = vsel %vm2360, 1.0, %v2419
      %v2453 = vsel %vm2360, 1.0, %v2424
      %v2454 = vsel %vm2360, 1.0, %v2429
      %v2455 = vsel %vm2360, 1.0, %v2434
      %v2456 = vsel %vm2360, 1.0, %v2439
      %2458 = vset.pattern.permute.xlu0 0
      %2459 = vperm.xlu0 %2458, %v2342
      %v2460 = vpop.permute.xlu0 %2459
      %2463 = vset.pattern.permute.xlu0 0
      %2464 = vperm.xlu0 %2463, %v2343
      %v2465 = vpop.permute.xlu0 %2464
      %2468 = vset.pattern.permute.xlu0 0
      %2469 = vperm.xlu0 %2468, %v2344
      %v2470 = vpop.permute.xlu0 %2469
      %2473 = vset.pattern.permute.xlu0 0
      %2474 = vperm.xlu0 %2473, %v2345
      %v2475 = vpop.permute.xlu0 %2474
      %2478 = vset.pattern.permute.xlu0 0
      %2479 = vperm.xlu0 %2478, %v2346
      %v2480 = vpop.permute.xlu0 %2479
      %2483 = vset.pattern.permute.xlu0 0
      %2484 = vperm.xlu0 %2483, %v2347
      %v2485 = vpop.permute.xlu0 %2484
      %2488 = vset.pattern.permute.xlu0 0
      %2489 = vperm.xlu0 %2488, %v2348
      %v2490 = vpop.permute.xlu0 %2489
      %2493 = vset.pattern.permute.xlu0 0
      %2494 = vperm.xlu0 %2493, %v2349
      %v2495 = vpop.permute.xlu0 %2494
      %2498 = vset.pattern.permute.xlu0 0
      %2499 = vperm.xlu0 %2498, %v2350
      %v2500 = vpop.permute.xlu0 %2499
      %2503 = vset.pattern.permute.xlu0 0
      %2504 = vperm.xlu0 %2503, %v2351
      %v2505 = vpop.permute.xlu0 %2504
      %2508 = vset.pattern.permute.xlu0 0
      %2509 = vperm.xlu0 %2508, %v2352
      %v2510 = vpop.permute.xlu0 %2509
      %2513 = vset.pattern.permute.xlu0 0
      %2514 = vperm.xlu0 %2513, %v2353
      %v2515 = vpop.permute.xlu0 %2514
      %2518 = vset.pattern.permute.xlu0 0
      %2519 = vperm.xlu0 %2518, %v2354
      %v2520 = vpop.permute.xlu0 %2519
      %2523 = vset.pattern.permute.xlu0 0
      %2524 = vperm.xlu0 %2523, %v2355
      %v2525 = vpop.permute.xlu0 %2524
      %2528 = vset.pattern.permute.xlu0 0
      %2529 = vperm.xlu0 %2528, %v2356
      %v2530 = vpop.permute.xlu0 %2529
      %2533 = vset.pattern.permute.xlu0 0
      %2534 = vperm.xlu0 %2533, %v2357
      %v2535 = vpop.permute.xlu0 %2534
      %v2537 = vsel %vm2360, 1.0, %v2460
      %v2538 = vsel %vm2360, 1.0, %v2465
      %v2539 = vsel %vm2360, 1.0, %v2470
      %v2540 = vsel %vm2360, 1.0, %v2475
      %v2541 = vsel %vm2360, 1.0, %v2480
      %v2542 = vsel %vm2360, 1.0, %v2485
      %v2543 = vsel %vm2360, 1.0, %v2490
      %v2544 = vsel %vm2360, 1.0, %v2495
      %v2545 = vsel %vm2360, 1.0, %v2500
      %v2546 = vsel %vm2360, 1.0, %v2505
      %v2547 = vsel %vm2360, 1.0, %v2510
      %v2548 = vsel %vm2360, 1.0, %v2515
      %v2549 = vsel %vm2360, 1.0, %v2520
      %v2550 = vsel %vm2360, 1.0, %v2525
      %v2551 = vsel %vm2360, 1.0, %v2530
      %v2552 = vsel %vm2360, 1.0, %v2535
      %v2553 = vmul.f32 %v1918, %v2441
      %v2554 = vmul.f32 %v1920, %v2442
      %v2555 = vmul.f32 %v1923, %v2443
      %v2556 = vmul.f32 %v1925, %v2444
      %v2557 = vmul.f32 %v1928, %v2445
      %v2558 = vmul.f32 %v1930, %v2446
      %v2559 = vmul.f32 %v1933, %v2447
      %v2560 = vmul.f32 %v1935, %v2448
      %v2561 = vmul.f32 %v1938, %v2449
      %v2562 = vmul.f32 %v1940, %v2450
      %v2563 = vmul.f32 %v1943, %v2451
      %v2564 = vmul.f32 %v1945, %v2452
      %v2565 = vmul.f32 %v1948, %v2453
      %v2566 = vmul.f32 %v1950, %v2454
      %v2567 = vmul.f32 %v1953, %v2455
      %v2568 = vmul.f32 %v1955, %v2456
      %vm2569 = vcmask 31744
      %2570 = vst.msk [vmem:[%s280] sm:$0xff] %vm2569, %v2553
      %2571 = vst.msk [vmem:[%s280 + $0x8] sm:$0xff] %vm2569, %v2554
      %2572 = vst.msk [vmem:[%s280 + $0x10] sm:$0xff] %vm2569, %v2555
      %2573 = vst.msk [vmem:[%s280 + $0x18] sm:$0xff] %vm2569, %v2556
      %2574 = vst.msk [vmem:[%s280 + $0x20] sm:$0xff] %vm2569, %v2557
      %2575 = vst.msk [vmem:[%s280 + $0x28] sm:$0xff] %vm2569, %v2558
      %2576 = vst.msk [vmem:[%s280 + $0x30] sm:$0xff] %vm2569, %v2559
      %2577 = vst.msk [vmem:[%s280 + $0x38] sm:$0xff] %vm2569, %v2560
      %2578 = vst.msk [vmem:[%s280 + $0x40] sm:$0xff] %vm2569, %v2561
      %2579 = vst.msk [vmem:[%s280 + $0x48] sm:$0xff] %vm2569, %v2562
      %2580 = vst.msk [vmem:[%s280 + $0x50] sm:$0xff] %vm2569, %v2563
      %2581 = vst.msk [vmem:[%s280 + $0x58] sm:$0xff] %vm2569, %v2564
      %2582 = vst.msk [vmem:[%s280 + $0x60] sm:$0xff] %vm2569, %v2565
      %2583 = vst.msk [vmem:[%s280 + $0x68] sm:$0xff] %vm2569, %v2566
      %2584 = vst.msk [vmem:[%s280 + $0x70] sm:$0xff] %vm2569, %v2567
      %2585 = vst.msk [vmem:[%s280 + $0x78] sm:$0xff] %vm2569, %v2568
      %v2586 = vmul.f32 %v1967, %v2537
      %v2587 = vmul.f32 %v1969, %v2538
      %v2588 = vmul.f32 %v1972, %v2539
      %v2589 = vmul.f32 %v1974, %v2540
      %v2590 = vmul.f32 %v1977, %v2541
      %v2591 = vmul.f32 %v1979, %v2542
      %v2592 = vmul.f32 %v1982, %v2543
      %v2593 = vmul.f32 %v1984, %v2544
      %v2594 = vmul.f32 %v1987, %v2545
      %v2595 = vmul.f32 %v1989, %v2546
      %v2596 = vmul.f32 %v1992, %v2547
      %v2597 = vmul.f32 %v1994, %v2548
      %v2598 = vmul.f32 %v1997, %v2549
      %v2599 = vmul.f32 %v1999, %v2550
      %v2600 = vmul.f32 %v2002, %v2551
      %v2601 = vmul.f32 %v2004, %v2552
      %2602 = vst.msk [vmem:[%s280 + $0x80] sm:$0xff] %vm2569, %v2586
      %2603 = vst.msk [vmem:[%s280 + $0x88] sm:$0xff] %vm2569, %v2587
      %2604 = vst.msk [vmem:[%s280 + $0x90] sm:$0xff] %vm2569, %v2588
      %2605 = vst.msk [vmem:[%s280 + $0x98] sm:$0xff] %vm2569, %v2589
      %2606 = vst.msk [vmem:[%s280 + $0xa0] sm:$0xff] %vm2569, %v2590
      %2607 = vst.msk [vmem:[%s280 + $0xa8] sm:$0xff] %vm2569, %v2591
      %2608 = vst.msk [vmem:[%s280 + $0xb0] sm:$0xff] %vm2569, %v2592
      %2609 = vst.msk [vmem:[%s280 + $0xb8] sm:$0xff] %vm2569, %v2593
      %2610 = vst.msk [vmem:[%s280 + $0xc0] sm:$0xff] %vm2569, %v2594
      %2611 = vst.msk [vmem:[%s280 + $0xc8] sm:$0xff] %vm2569, %v2595
      %2612 = vst.msk [vmem:[%s280 + $0xd0] sm:$0xff] %vm2569, %v2596
      %2613 = vst.msk [vmem:[%s280 + $0xd8] sm:$0xff] %vm2569, %v2597
      %2614 = vst.msk [vmem:[%s280 + $0xe0] sm:$0xff] %vm2569, %v2598
      %2615 = vst.msk [vmem:[%s280 + $0xe8] sm:$0xff] %vm2569, %v2599
      %2616 = vst.msk [vmem:[%s280 + $0xf0] sm:$0xff] %vm2569, %v2600
      %2617 = vst.msk [vmem:[%s280 + $0xf8] sm:$0xff] %vm2569, %v2601
      %s2618 = smul.u32 32, %s18
      %p2619 = scmp.lt.s32.totalorder %s2618, 127
      %s2620 = scalar_select %p2619, %s2618, 127
      %s2621 = smul.addr %s2620, 8
      %s2622 = scalar_lea.vmem %s7, %s2621
      // Predicated region
      $region49: #{tpu_custom_call.1} parent=47 // pred_check
        %p2623 = pneg %p188
      $region50: #{tpu_custom_call.1} parent=47 // pred_check_branch
        %2625 = sbr.rel (%p2623) target = $region52
      $region51: #{tpu_custom_call.1} parent=47 // pred_region
        %s2626 = smul.u32 32, %s18
      $region52: #{tpu_custom_call.1} parent=47 // pred_fallthru
        _
    $region48: #{tpu_custom_call.1} parent=5 // pred_fallthru
      _
    %p2627 = scmp.le.s32.totalorder 2, %s13
    // Predicated region
    $region53: #{tpu_custom_call.1} parent=5 // pred_check
      %p2628 = pneg %p2627
    $region54: #{tpu_custom_call.1} parent=5 // pred_check_branch
      %2630 = sbr.rel (%p2628) target = $region56
    $region55: #{tpu_custom_call.1} parent=5 // pred_region
      %s2631 = ssub.s32 %s13, 2
      // Predicated region
      $region57: #{tpu_custom_call.1} parent=55 // pred_check
        %p2632 = pneg %p194
      $region58: #{tpu_custom_call.1} parent=55 // pred_check_branch
        %2634 = sbr.rel (%p2632) target = $region60
      $region59: #{tpu_custom_call.1} parent=55 // pred_region
        %s2635 = smul.u32 32, %s19
        %p2636 = scmp.lt.s32.totalorder %s2635, 127
        %s2637 = scalar_select %p2636, %s2635, 127
        %s2638 = smul.addr %s2637, 8
        %s2639 = scalar_lea.vmem %s7, %s2638
      $region60: #{tpu_custom_call.1} parent=55 // pred_fallthru
        _
    $region56: #{tpu_custom_call.1} parent=5 // pred_fallthru
      _
  $region6: #{tpu_custom_call.1} parent=0 // loop_footer
    %s17 = sadd.s32 1, %s13
  $region7: #{tpu_custom_call.1} parent=0 // loop_footer_branch
    %12 = sbr.rel target = $region3
  $region8: #{tpu_custom_call.1} parent=0 // loop_exit
    _

</llo_original>
